<compile_context>
chip_gen: v7x
topology: tpu7x:2x2x1
jax: 0.10.0
libtpu: 0.0.40
codegen_flags: <defaults>
</compile_context>

<pallas_src>
import functools
import math

import jax
import jax.numpy as jnp
from jax import lax
from jax.experimental import pallas as pl
from jax.experimental.pallas import tpu as pltpu


def _round_up(x, m):
    return (x + m - 1) // m * m


def _vmem_capacity_bytes():
    try:
        info = pltpu.get_tpu_info()
        cap = getattr(info, "vmem_capacity_bytes", None)
        if cap:
            return int(cap)
    except Exception:
        pass
    return 64 << 20          # conservative fallback (v7x-sized VMEM)


def _choose_budget():
    cap = _vmem_capacity_bytes()
    if cap >= (96 << 20):    # v5e / v6e: 128 MiB physical VMEM
        return 96 << 20, 100 << 20
    return 40 << 20, 48 << 20  # v7x: 64 MiB physical VMEM


def _choose_tc(T, B, D, Hp, x_bytes, out_bytes, w_bytes, budget, tc_cap=256):
    """Largest chunk length (multiple of 8, or == T) that fits the VMEM budget."""
    Gp = 3 * Hp
    fixed = (w_bytes * (D * Gp + Hp * Gp + Hp * D)   # resident fused weights
             + 4 * 3 * D                             # bias / gamma / beta
             + 4 * 3 * B * Hp)                       # h0 + hT + h carry
    per_t = (2 * B * D * x_bytes                     # streamed x (double-buffered)
             + 2 * B * D * out_bytes                 # streamed belief (double-buffered)
             + 4 * B * Gp                            # xp scratch
             + 4 * B * Hp)                           # hs scratch
    tc = max(8, (budget - fixed) // max(per_t, 1))
    tc = int(min(tc, tc_cap))
    if tc >= T:
        return T                                     # full-extent block (legal for any T)
    return max(8, (tc // 8) * 8)                     # (8,128)-rule on the sublane dim


def _const_spec(shape):
    """BlockSpec for a weight that never changes block index (single-buffered)."""
    ndim = len(shape)
    idx = lambda t: (0,) * ndim
    try:
        return pl.BlockSpec(shape, idx, pipeline_mode=pl.Buffered(1))
    except TypeError:   # older BlockSpec without pipeline_mode
        return pl.BlockSpec(shape, idx)


def _gru_nbt_kernel(x_ref,                          # (B, Tc, D)   streamed chunk
                    wih_ref,                        # (D, 3Hp)     fused [r|z|n]
                    whh_ref,                        # (Hp, 3Hp)    fused [r|z|n]
                    h0_ref,                         # (B, Hp)
                    wint_ref,                       # (Hp, D)
                    bint_ref, gamma_ref, beta_ref,  # (1, D) each
                    out_ref,                        # (B, Tc, D)   streamed chunk
                    hT_ref,                         # (B, Hp)
                    h_ref,                          # scratch: carried hidden state
                    xp_ref,                         # scratch: (B, Tc, 3Hp)
                    hs_ref,                         # scratch: (B, Tc, Hp)
                    *, tc, batch, h_pad, d_real, t_total, ragged, unroll):
    f32 = jnp.float32

    @pl.when(pl.program_id(0) == 0)
    def _init():
        h_ref[...] = h0_ref[...]

    # ---- hoisted input projection: one large MXU matmul per batch row for the
    # whole chunk.  GRU bias_ih / bias_hh are constant_()-initialised to 0.
    wih = wih_ref[...]
    for b in range(batch):
        xp_ref[b] = jnp.dot(x_ref[b].astype(wih.dtype), wih,
                            preferred_element_type=f32)

    whh = whh_ref[...]                 # resident across the recurrence
    base = pl.program_id(0) * tc       # global timestep of this chunk's step 0

    def step(t, h):
        # Gate inputs for timestep t: gather one row per batch element.
        rows = [xp_ref[b, pl.ds(t, 1), :] for b in range(batch)]
        xp_t = rows[0] if batch == 1 else jnp.concatenate(rows, axis=0)
        hp_t = jnp.dot(h.astype(whh.dtype), whh,
                       preferred_element_type=f32)                    # (B, 3Hp)
        r = jax.nn.sigmoid(xp_t[:, 0:h_pad] + hp_t[:, 0:h_pad])
        z = jax.nn.sigmoid(xp_t[:, h_pad:2 * h_pad] + hp_t[:, h_pad:2 * h_pad])
        n = jnp.tanh(xp_t[:, 2 * h_pad:] + r * hp_t[:, 2 * h_pad:])
        h_new = (1.0 - z) * n + z * h
        if ragged:
            # Mask the ragged tail of the last chunk: keep h unchanged there.
            h_new = jnp.where(base + t < t_total, h_new, h)
        for b in range(batch):
            hs_ref[b, pl.ds(t, 1), :] = h_new[b:b + 1, :]
        return h_new

    h_final = lax.fori_loop(0, tc, step, h_ref[...], unroll=unroll)
    h_ref[...] = h_final

    @pl.when(pl.program_id(0) == pl.num_programs(0) - 1)
    def _final():
        hT_ref[...] = h_final

    # ---- epilogue: batched Linear(H->D) + LayerNorm for the whole chunk.
    # Dropout(dropout_rate) in eval mode is identity.
    wint = wint_ref[...]
    bint = bint_ref[...]
    gamma = gamma_ref[...]
    beta = beta_ref[...]
    inv_d = 1.0 / float(d_real)
    for b in range(batch):
        y = jnp.dot(hs_ref[b].astype(wint.dtype), wint,
                    preferred_element_type=f32) + bint
        mu = jnp.sum(y, axis=-1, keepdims=True) * inv_d
        yc = y - mu
        var = jnp.sum(yc * yc, axis=-1, keepdims=True) * inv_d   # centered, 2-pass
        yn = yc * lax.rsqrt(var + 1e-5)
        out_ref[b] = (yn * gamma + beta).astype(out_ref.dtype)


def recurrent_neural_belief_tracker(inputs, params, hidden_state=None,
                                    mxu_dtype=jnp.bfloat16, out_dtype=None,
                                    tc_cap=256):
    """inputs: (B, T, D_in) batch-first.
    Returns (belief_embedding (B, T, D_in), context (1, B, H))."""
    B, T, D = inputs.shape
    H = params["w_hh"].shape[1]
    f32 = jnp.float32
    w_dt = f32 if mxu_dtype is None else mxu_dtype
    out_dt = inputs.dtype if out_dtype is None else out_dtype

    Hp = _round_up(H, 128)
    Gp = 3 * Hp

    # --- fuse + zero-pad gate weights (torch gate order r,z,n; each gate lands
    #     on a 128-lane-aligned Hp block; padded rows/cols are zero so padded
    #     hidden columns stay exactly zero through the recurrence). ---
    def fuse_gates(w, k_real, k_rows):      # w: (3H, k_real) -> (k_rows, Gp)
        out = jnp.zeros((k_rows, Gp), f32)
        for gi in range(3):
            out = out.at[:k_real, gi * Hp:gi * Hp + H].set(
                w[gi * H:(gi + 1) * H, :].T)
        return out.astype(w_dt)

    wih_f = fuse_gates(params["w_ih"].astype(f32), D, D)
    whh_f = fuse_gates(params["w_hh"].astype(f32), H, Hp)
    wint = jnp.zeros((Hp, D), f32).at[:H, :].set(
        params["w_int"].astype(f32).T).astype(w_dt)
    bint = params["b_int"].astype(f32).reshape(1, D)
    gamma = params["gamma"].astype(f32).reshape(1, D)
    beta = params["beta"].astype(f32).reshape(1, D)

    if hidden_state is None:
        h0 = jnp.zeros((B, Hp), f32)         # rnn_zero_init=False -> zero state
    else:
        h0 = jnp.zeros((B, Hp), f32).at[:, :H].set(
            hidden_state.reshape(B, H).astype(f32))

    budget, vmem_limit = _choose_budget()
    x_bytes = jnp.dtype(inputs.dtype).itemsize
    out_bytes = jnp.dtype(out_dt).itemsize
    w_bytes = jnp.dtype(w_dt).itemsize
    tc = _choose_tc(T, B, D, Hp, x_bytes, out_bytes, w_bytes, budget, tc_cap)
    n_chunks = pl.cdiv(T, tc)
    ragged = (T % tc) != 0
    unroll = int(min(tc, 8))

    kernel = functools.partial(
        _gru_nbt_kernel, tc=tc, batch=B, h_pad=Hp, d_real=D,
        t_total=T, ragged=ragged, unroll=unroll)

    out, hT = pl.pallas_call(
        kernel,
        out_shape=(jax.ShapeDtypeStruct((B, T, D), out_dt),
                   jax.ShapeDtypeStruct((B, Hp), f32)),
        grid_spec=pltpu.PrefetchScalarGridSpec(
            num_scalar_prefetch=0,
            grid=(n_chunks,),
            in_specs=[
                pl.BlockSpec((B, tc, D), lambda t: (0, t, 0)),   # streamed x
                _const_spec((D, Gp)),     # fused W_ih
                _const_spec((Hp, Gp)),    # fused W_hh
                _const_spec((B, Hp)),     # h0
                _const_spec((Hp, D)),     # W_intermediate
                _const_spec((1, D)),      # b_intermediate
                _const_spec((1, D)),      # LN gamma
                _const_spec((1, D)),      # LN beta
            ],
            out_specs=(
                pl.BlockSpec((B, tc, D), lambda t: (0, t, 0)),   # belief
                pl.BlockSpec((B, Hp), lambda t: (0, 0)),         # final hidden
            ),
            scratch_shapes=[
                pltpu.VMEM((B, Hp), f32),        # carried hidden state
                pltpu.VMEM((B, tc, Gp), f32),    # hoisted input projections
                pltpu.VMEM((B, tc, Hp), f32),    # per-step hidden states
            ],
        ),
        compiler_params=pltpu.CompilerParams(
            dimension_semantics=("arbitrary",),
            vmem_limit_bytes=vmem_limit,
        ),
    )(inputs, wih_f, whh_f, h0, wint, bint, gamma, beta)

    belief = out
    context = hT[:, :H][None]                # (hidden_layers=1, B, H)
    return belief, context


def init_params(key, input_size, hidden_size):
    """Deterministic synthetic parameters matching the PyTorch module's shapes."""
    k_ih, k_hh, k_w, k_b = jax.random.split(key, 4)
    H, D = hidden_size, input_size
    std_ih = math.sqrt(2.0 / (3 * H + D))
    w_ih = jax.random.normal(k_ih, (3 * H, D), jnp.float32) * std_ih   # xavier_normal_
    std_hh = math.sqrt(2.0 / (3 * H + H))
    w_hh = jax.random.normal(k_hh, (3 * H, H), jnp.float32) * std_hh   # xavier_normal_
    w_int = jax.random.normal(k_w, (D, H), jnp.float32) / math.sqrt(H)
    b_int = jax.random.normal(k_b, (D,), jnp.float32) * 0.01
    gamma = jnp.ones((D,), jnp.float32)      # LayerNorm defaults
    beta = jnp.zeros((D,), jnp.float32)
    return dict(w_ih=w_ih, w_hh=w_hh, w_int=w_int, b_int=b_int,
                gamma=gamma, beta=beta)


def _reference_forward(inputs, params, hidden_state=None):
    """Pure-JAX reference of the same forward pass (for verification)."""
    B, T, D = inputs.shape
    H = params["w_hh"].shape[1]
    w_ih, w_hh = params["w_ih"], params["w_hh"]
    wir, wiz, win = w_ih[:H].T, w_ih[H:2 * H].T, w_ih[2 * H:].T
    whr, whz, whn = w_hh[:H].T, w_hh[H:2 * H].T, w_hh[2 * H:].T
    wint, bint = params["w_int"].T, params["b_int"]
    gamma, beta = params["gamma"], params["beta"]
    h0 = (jnp.zeros((B, H), jnp.float32) if hidden_state is None
          else hidden_state.reshape(B, H).astype(jnp.float32))
    hi = lax.Precision.HIGHEST

    def step(h, x_t):
        r = jax.nn.sigmoid(jnp.dot(x_t, wir, precision=hi)
                           + jnp.dot(h, whr, precision=hi))
        z = jax.nn.sigmoid(jnp.dot(x_t, wiz, precision=hi)
                           + jnp.dot(h, whz, precision=hi))
        n = jnp.tanh(jnp.dot(x_t, win, precision=hi)
                     + r * jnp.dot(h, whn, precision=hi))
        h_new = (1.0 - z) * n + z * h
        y = jnp.dot(h_new, wint, precision=hi) + bint
        mu = jnp.mean(y, axis=-1, keepdims=True)
        var = jnp.mean((y - mu) ** 2, axis=-1, keepdims=True)
        y = (y - mu) * lax.rsqrt(var + 1e-5) * gamma + beta
        return h_new, y

    hT, ys = lax.scan(step, h0, jnp.transpose(inputs, (1, 0, 2)))
    return jnp.transpose(ys, (1, 0, 2)), hT[None]


if __name__ == "__main__":
    key = jax.random.PRNGKey(0)
    k_param, k_x, k_x2 = jax.random.split(key, 3)

    # Small shapes consistent with the module's forward:
    # inputs (batch, seq, input_size), GRU hidden size H.
    B, T, D_in, H = 2, 6, 64, 32
    params = init_params(k_param, input_size=D_in, hidden_size=H)
    inputs = jax.random.normal(k_x, (B, T, D_in), jnp.float32)

    ref_belief, ref_context = _reference_forward(inputs, params)

    # --- f32 MXU path: strict check against the pure-JAX reference. ---
    belief32, context32 = recurrent_neural_belief_tracker(
        inputs, params, mxu_dtype=None)
    belief32 = jax.block_until_ready(belief32)
    context32 = jax.block_until_ready(context32)
    assert belief32.shape == (B, T, D_in), belief32.shape
    assert context32.shape == (1, B, H), context32.shape
    assert jnp.allclose(belief32, ref_belief, atol=1e-2, rtol=1e-2), \
        float(jnp.max(jnp.abs(belief32 - ref_belief)))
    assert jnp.allclose(context32, ref_context, atol=1e-2, rtol=1e-2), \
        float(jnp.max(jnp.abs(context32 - ref_context)))

    # --- default bf16-MXU path (f32 accumulation / gate math): looser check. ---
    belief16, context16 = recurrent_neural_belief_tracker(inputs, params)
    belief16 = jax.block_until_ready(belief16)
    assert belief16.shape == (B, T, D_in) and context16.shape == (1, B, H)
    err_b = float(jnp.max(jnp.abs(belief16 - ref_belief)))
    err_c = float(jnp.max(jnp.abs(context16 - ref_context)))
    assert err_b < 1.5e-1, err_b
    assert err_c < 1.0e-1, err_c

    # --- user-supplied hidden_state branch (f32 path). ---
    belief_h, context_h = recurrent_neural_belief_tracker(
        inputs, params, hidden_state=context32, mxu_dtype=None)
    belief_h = jax.block_until_ready(belief_h)
    ref_belief_h, ref_context_h = _reference_forward(
        inputs, params, hidden_state=context32)
    assert jnp.allclose(belief_h, ref_belief_h, atol=1e-2, rtol=1e-2)
    assert jnp.allclose(context_h, ref_context_h, atol=1e-2, rtol=1e-2)

    # --- multi-chunk + ragged-tail path (T not a multiple of the chunk size). ---
    T2 = 20
    inputs2 = jax.random.normal(k_x2, (B, T2, D_in), jnp.float32)
    belief_r, context_r = recurrent_neural_belief_tracker(
        inputs2, params, mxu_dtype=None, tc_cap=8)      # tc=8 -> chunks 8,8,4
    belief_r = jax.block_until_ready(belief_r)
    ref_belief_r, ref_context_r = _reference_forward(inputs2, params)
    assert belief_r.shape == (B, T2, D_in)
    assert jnp.allclose(belief_r, ref_belief_r, atol=1e-2, rtol=1e-2), \
        float(jnp.max(jnp.abs(belief_r - ref_belief_r)))
    assert jnp.allclose(context_r, ref_context_r, atol=1e-2, rtol=1e-2), \
        float(jnp.max(jnp.abs(context_r - ref_context_r)))

    print("KERNEL_OK")
</pallas_src>

<mosaic_0001>
module attributes {stable_mosaic.version = 11 : i64} {
  func.func @_gru_nbt_kernel(%arg0: i32, %arg1: memref<2x6x64xf32, #tpu.memory_space<vmem>>, %arg2: memref<64x384xf32, #tpu.memory_space<vmem>>, %arg3: memref<128x384xf32, #tpu.memory_space<vmem>>, %arg4: memref<2x128xf32, #tpu.memory_space<vmem>>, %arg5: memref<128x64xf32, #tpu.memory_space<vmem>>, %arg6: memref<1x64xf32, #tpu.memory_space<vmem>>, %arg7: memref<1x64xf32, #tpu.memory_space<vmem>>, %arg8: memref<1x64xf32, #tpu.memory_space<vmem>>, %arg9: memref<2x6x64xf32, #tpu.memory_space<vmem>>, %arg10: memref<2x128xf32, #tpu.memory_space<vmem>>, %arg11: memref<2x128xf32, #tpu.memory_space<vmem>>, %arg12: memref<2x6x384xf32, #tpu.memory_space<vmem>>, %arg13: memref<2x6x128xf32, #tpu.memory_space<vmem>>) attributes {dimension_semantics = [#tpu.dimension_semantics<arbitrary>], iteration_bounds = array<i64: 1>, scalar_prefetch = 0 : i64, scratch_operands = 3 : i64, tpu.core_type = #tpu.core_type<tc>, window_params = [{transform_indices = @transform_0, window_bounds = array<i64: 2, 6, 64>}, {pipeline_mode = #tpu.pipeline_mode<synchronous>, transform_indices = @transform_1, window_bounds = array<i64: 64, 384>}, {pipeline_mode = #tpu.pipeline_mode<synchronous>, transform_indices = @transform_2, window_bounds = array<i64: 128, 384>}, {pipeline_mode = #tpu.pipeline_mode<synchronous>, transform_indices = @transform_3, window_bounds = array<i64: 2, 128>}, {pipeline_mode = #tpu.pipeline_mode<synchronous>, transform_indices = @transform_4, window_bounds = array<i64: 128, 64>}, {pipeline_mode = #tpu.pipeline_mode<synchronous>, transform_indices = @transform_5, window_bounds = array<i64: 1, 64>}, {pipeline_mode = #tpu.pipeline_mode<synchronous>, transform_indices = @transform_6, window_bounds = array<i64: 1, 64>}, {pipeline_mode = #tpu.pipeline_mode<synchronous>, transform_indices = @transform_7, window_bounds = array<i64: 1, 64>}, {transform_indices = @transform_8, window_bounds = array<i64: 2, 6, 64>}, {pipeline_mode = #tpu.pipeline_mode<synchronous>, transform_indices = @transform_9, window_bounds = array<i64: 2, 128>}]} {
    %c0_i32 = arith.constant 0 : i32
    %0 = arith.cmpi eq, %arg0, %c0_i32 : i32
    %1 = arith.extui %0 : i1 to i32
    %c0_i32_0 = arith.constant 0 : i32
    %2 = arith.cmpi ne, %1, %c0_i32_0 : i32
    scf.if %2 {
      %c0_127 = arith.constant 0 : index
      %c0_128 = arith.constant 0 : index
      %346 = vector.load %arg4[%c0_127, %c0_128] : memref<2x128xf32, #tpu.memory_space<vmem>>, vector<2x128xf32>
      %c0_129 = arith.constant 0 : index
      %c0_130 = arith.constant 0 : index
      %347 = vector.load %arg11[%c0_129, %c0_130] : memref<2x128xf32, #tpu.memory_space<vmem>>, vector<2x128xf32>
      tpu.vector_store %arg11[%c0_129, %c0_130], %346 {strides = array<i32>} : memref<2x128xf32, #tpu.memory_space<vmem>>, vector<2x128xf32>,
    } else {
    }
    %c0 = arith.constant 0 : index
    %c0_1 = arith.constant 0 : index
    %3 = vector.load %arg2[%c0, %c0_1] : memref<64x384xf32, #tpu.memory_space<vmem>>, vector<64x384xf32>
    %c0_2 = arith.constant 0 : index
    %c0_3 = arith.constant 0 : index
    %c0_4 = arith.constant 0 : index
    %4 = vector.load %arg1[%c0_2, %c0_3, %c0_4] : memref<2x6x64xf32, #tpu.memory_space<vmem>>, vector<1x6x64xf32>
    %5 = vector.shape_cast %4 : vector<1x6x64xf32> to vector<6x64xf32>
    %cst = arith.constant dense<0.000000e+00> : vector<6x384xf32>
    %6 = tpu.matmul %5, %3, %cst {dimension_numbers = #tpu.dot_dimension_numbers<[1], [0], [0], [1], [0, 0, 1, 1], [], []>} : vector<6x64xf32>, vector<64x384xf32>, vector<6x384xf32> -> vector<6x384xf32>
    %c0_5 = arith.constant 0 : index
    %c0_6 = arith.constant 0 : index
    %c0_7 = arith.constant 0 : index
    %7 = vector.load %arg12[%c0_5, %c0_6, %c0_7] : memref<2x6x384xf32, #tpu.memory_space<vmem>>, vector<1x6x384xf32>
    %8 = vector.shape_cast %7 : vector<1x6x384xf32> to vector<6x384xf32>
    %9 = vector.shape_cast %6 : vector<6x384xf32> to vector<1x6x384xf32>
    tpu.vector_store %arg12[%c0_5, %c0_6, %c0_7], %9 {strides = array<i32>} : memref<2x6x384xf32, #tpu.memory_space<vmem>>, vector<1x6x384xf32>,
    %c1 = arith.constant 1 : index
    %c0_8 = arith.constant 0 : index
    %c0_9 = arith.constant 0 : index
    %10 = vector.load %arg1[%c1, %c0_8, %c0_9] : memref<2x6x64xf32, #tpu.memory_space<vmem>>, vector<1x6x64xf32>
    %11 = vector.shape_cast %10 : vector<1x6x64xf32> to vector<6x64xf32>
    %cst_10 = arith.constant dense<0.000000e+00> : vector<6x384xf32>
    %12 = tpu.matmul %11, %3, %cst_10 {dimension_numbers = #tpu.dot_dimension_numbers<[1], [0], [0], [1], [0, 0, 1, 1], [], []>} : vector<6x64xf32>, vector<64x384xf32>, vector<6x384xf32> -> vector<6x384xf32>
    %c1_11 = arith.constant 1 : index
    %c0_12 = arith.constant 0 : index
    %c0_13 = arith.constant 0 : index
    %13 = vector.load %arg12[%c1_11, %c0_12, %c0_13] : memref<2x6x384xf32, #tpu.memory_space<vmem>>, vector<1x6x384xf32>
    %14 = vector.shape_cast %13 : vector<1x6x384xf32> to vector<6x384xf32>
    %15 = vector.shape_cast %12 : vector<6x384xf32> to vector<1x6x384xf32>
    tpu.vector_store %arg12[%c1_11, %c0_12, %c0_13], %15 {strides = array<i32>} : memref<2x6x384xf32, #tpu.memory_space<vmem>>, vector<1x6x384xf32>,
    %c0_14 = arith.constant 0 : index
    %c0_15 = arith.constant 0 : index
    %16 = vector.load %arg3[%c0_14, %c0_15] : memref<128x384xf32, #tpu.memory_space<vmem>>, vector<128x384xf32>
    %c0_16 = arith.constant 0 : index
    %c0_17 = arith.constant 0 : index
    %17 = vector.load %arg11[%c0_16, %c0_17] : memref<2x128xf32, #tpu.memory_space<vmem>>, vector<2x128xf32>
    %c0_i32_18 = arith.constant 0 : i32
    %c0_19 = arith.constant 0 : index
    %18 = arith.index_cast %c0_i32_18 : i32 to index
    %c0_20 = arith.constant 0 : index
    %19 = vector.load %arg12[%c0_19, %18, %c0_20] : memref<2x6x384xf32, #tpu.memory_space<vmem>>, vector<1x1x384xf32>
    %20 = vector.shape_cast %19 : vector<1x1x384xf32> to vector<1x384xf32>
    %c1_21 = arith.constant 1 : index
    %21 = arith.index_cast %c0_i32_18 : i32 to index
    %c0_22 = arith.constant 0 : index
    %22 = vector.load %arg12[%c1_21, %21, %c0_22] : memref<2x6x384xf32, #tpu.memory_space<vmem>>, vector<1x1x384xf32>
    %23 = vector.shape_cast %22 : vector<1x1x384xf32> to vector<1x384xf32>
    %24 = tpu.concatenate %20, %23 in 0 : vector<1x384xf32>, vector<1x384xf32> -> vector<2x384xf32>
    %cst_23 = arith.constant dense<0.000000e+00> : vector<2x384xf32>
    %25 = tpu.matmul %17, %16, %cst_23 {dimension_numbers = #tpu.dot_dimension_numbers<[1], [0], [0], [1], [0, 0, 1, 1], [], []>} : vector<2x128xf32>, vector<128x384xf32>, vector<2x384xf32> -> vector<2x384xf32>
    %26 = vector.extract_strided_slice %24 {offsets = [0, 0], sizes = [2, 128], strides = [1, 1]} : vector<2x384xf32> to vector<2x128xf32>
    %27 = vector.extract_strided_slice %25 {offsets = [0, 0], sizes = [2, 128], strides = [1, 1]} : vector<2x384xf32> to vector<2x128xf32>
    %28 = arith.addf %26, %27 : vector<2x128xf32>
    %29 = arith.negf %28 : vector<2x128xf32>
    %30 = math.exp %29 : vector<2x128xf32>
    %cst_24 = arith.constant 1.000000e+00 : f32
    %31 = vector.broadcast %cst_24 : f32 to vector<2x128xf32>
    %32 = arith.addf %31, %30 : vector<2x128xf32>
    %33 = arith.divf %31, %32 : vector<2x128xf32>
    %34 = vector.extract_strided_slice %24 {offsets = [0, 128], sizes = [2, 128], strides = [1, 1]} : vector<2x384xf32> to vector<2x128xf32>
    %35 = vector.extract_strided_slice %25 {offsets = [0, 128], sizes = [2, 128], strides = [1, 1]} : vector<2x384xf32> to vector<2x128xf32>
    %36 = arith.addf %34, %35 : vector<2x128xf32>
    %37 = arith.negf %36 : vector<2x128xf32>
    %38 = math.exp %37 : vector<2x128xf32>
    %cst_25 = arith.constant 1.000000e+00 : f32
    %39 = vector.broadcast %cst_25 : f32 to vector<2x128xf32>
    %40 = arith.addf %39, %38 : vector<2x128xf32>
    %41 = arith.divf %39, %40 : vector<2x128xf32>
    %42 = vector.extract_strided_slice %24 {offsets = [0, 256], sizes = [2, 128], strides = [1, 1]} : vector<2x384xf32> to vector<2x128xf32>
    %43 = vector.extract_strided_slice %25 {offsets = [0, 256], sizes = [2, 128], strides = [1, 1]} : vector<2x384xf32> to vector<2x128xf32>
    %44 = arith.mulf %33, %43 : vector<2x128xf32>
    %45 = arith.addf %42, %44 : vector<2x128xf32>
    %46 = math.tanh %45 : vector<2x128xf32>
    %cst_26 = arith.constant 1.000000e+00 : f32
    %47 = vector.broadcast %cst_26 : f32 to vector<2x128xf32>
    %48 = arith.subf %47, %41 : vector<2x128xf32>
    %49 = arith.mulf %48, %46 : vector<2x128xf32>
    %50 = arith.mulf %41, %17 : vector<2x128xf32>
    %51 = arith.addf %49, %50 : vector<2x128xf32>
    %52 = vector.extract_strided_slice %51 {offsets = [0, 0], sizes = [1, 128], strides = [1, 1]} : vector<2x128xf32> to vector<1x128xf32>
    %c0_27 = arith.constant 0 : index
    %53 = arith.index_cast %c0_i32_18 : i32 to index
    %c0_28 = arith.constant 0 : index
    %54 = vector.load %arg13[%c0_27, %53, %c0_28] : memref<2x6x128xf32, #tpu.memory_space<vmem>>, vector<1x1x128xf32>
    %55 = vector.shape_cast %54 : vector<1x1x128xf32> to vector<1x128xf32>
    %56 = vector.shape_cast %52 : vector<1x128xf32> to vector<1x1x128xf32>
    tpu.vector_store %arg13[%c0_27, %53, %c0_28], %56 {strides = array<i32>} : memref<2x6x128xf32, #tpu.memory_space<vmem>>, vector<1x1x128xf32>,
    %57 = vector.extract_strided_slice %51 {offsets = [1, 0], sizes = [1, 128], strides = [1, 1]} : vector<2x128xf32> to vector<1x128xf32>
    %c1_29 = arith.constant 1 : index
    %58 = arith.index_cast %c0_i32_18 : i32 to index
    %c0_30 = arith.constant 0 : index
    %59 = vector.load %arg13[%c1_29, %58, %c0_30] : memref<2x6x128xf32, #tpu.memory_space<vmem>>, vector<1x1x128xf32>
    %60 = vector.shape_cast %59 : vector<1x1x128xf32> to vector<1x128xf32>
    %61 = vector.shape_cast %57 : vector<1x128xf32> to vector<1x1x128xf32>
    tpu.vector_store %arg13[%c1_29, %58, %c0_30], %61 {strides = array<i32>} : memref<2x6x128xf32, #tpu.memory_space<vmem>>, vector<1x1x128xf32>,
    %c1_i32 = arith.constant 1 : i32
    %c0_31 = arith.constant 0 : index
    %62 = arith.index_cast %c1_i32 : i32 to index
    %c0_32 = arith.constant 0 : index
    %63 = vector.load %arg12[%c0_31, %62, %c0_32] : memref<2x6x384xf32, #tpu.memory_space<vmem>>, vector<1x1x384xf32>
    %64 = vector.shape_cast %63 : vector<1x1x384xf32> to vector<1x384xf32>
    %c1_33 = arith.constant 1 : index
    %65 = arith.index_cast %c1_i32 : i32 to index
    %c0_34 = arith.constant 0 : index
    %66 = vector.load %arg12[%c1_33, %65, %c0_34] : memref<2x6x384xf32, #tpu.memory_space<vmem>>, vector<1x1x384xf32>
    %67 = vector.shape_cast %66 : vector<1x1x384xf32> to vector<1x384xf32>
    %68 = tpu.concatenate %64, %67 in 0 : vector<1x384xf32>, vector<1x384xf32> -> vector<2x384xf32>
    %cst_35 = arith.constant dense<0.000000e+00> : vector<2x384xf32>
    %69 = tpu.matmul %51, %16, %cst_35 {dimension_numbers = #tpu.dot_dimension_numbers<[1], [0], [0], [1], [0, 0, 1, 1], [], []>} : vector<2x128xf32>, vector<128x384xf32>, vector<2x384xf32> -> vector<2x384xf32>
    %70 = vector.extract_strided_slice %68 {offsets = [0, 0], sizes = [2, 128], strides = [1, 1]} : vector<2x384xf32> to vector<2x128xf32>
    %71 = vector.extract_strided_slice %69 {offsets = [0, 0], sizes = [2, 128], strides = [1, 1]} : vector<2x384xf32> to vector<2x128xf32>
    %72 = arith.addf %70, %71 : vector<2x128xf32>
    %73 = arith.negf %72 : vector<2x128xf32>
    %74 = math.exp %73 : vector<2x128xf32>
    %cst_36 = arith.constant 1.000000e+00 : f32
    %75 = vector.broadcast %cst_36 : f32 to vector<2x128xf32>
    %76 = arith.addf %75, %74 : vector<2x128xf32>
    %77 = arith.divf %75, %76 : vector<2x128xf32>
    %78 = vector.extract_strided_slice %68 {offsets = [0, 128], sizes = [2, 128], strides = [1, 1]} : vector<2x384xf32> to vector<2x128xf32>
    %79 = vector.extract_strided_slice %69 {offsets = [0, 128], sizes = [2, 128], strides = [1, 1]} : vector<2x384xf32> to vector<2x128xf32>
    %80 = arith.addf %78, %79 : vector<2x128xf32>
    %81 = arith.negf %80 : vector<2x128xf32>
    %82 = math.exp %81 : vector<2x128xf32>
    %cst_37 = arith.constant 1.000000e+00 : f32
    %83 = vector.broadcast %cst_37 : f32 to vector<2x128xf32>
    %84 = arith.addf %83, %82 : vector<2x128xf32>
    %85 = arith.divf %83, %84 : vector<2x128xf32>
    %86 = vector.extract_strided_slice %68 {offsets = [0, 256], sizes = [2, 128], strides = [1, 1]} : vector<2x384xf32> to vector<2x128xf32>
    %87 = vector.extract_strided_slice %69 {offsets = [0, 256], sizes = [2, 128], strides = [1, 1]} : vector<2x384xf32> to vector<2x128xf32>
    %88 = arith.mulf %77, %87 : vector<2x128xf32>
    %89 = arith.addf %86, %88 : vector<2x128xf32>
    %90 = math.tanh %89 : vector<2x128xf32>
    %cst_38 = arith.constant 1.000000e+00 : f32
    %91 = vector.broadcast %cst_38 : f32 to vector<2x128xf32>
    %92 = arith.subf %91, %85 : vector<2x128xf32>
    %93 = arith.mulf %92, %90 : vector<2x128xf32>
    %94 = arith.mulf %85, %51 : vector<2x128xf32>
    %95 = arith.addf %93, %94 : vector<2x128xf32>
    %96 = vector.extract_strided_slice %95 {offsets = [0, 0], sizes = [1, 128], strides = [1, 1]} : vector<2x128xf32> to vector<1x128xf32>
    %c0_39 = arith.constant 0 : index
    %97 = arith.index_cast %c1_i32 : i32 to index
    %c0_40 = arith.constant 0 : index
    %98 = vector.load %arg13[%c0_39, %97, %c0_40] : memref<2x6x128xf32, #tpu.memory_space<vmem>>, vector<1x1x128xf32>
    %99 = vector.shape_cast %98 : vector<1x1x128xf32> to vector<1x128xf32>
    %100 = vector.shape_cast %96 : vector<1x128xf32> to vector<1x1x128xf32>
    tpu.vector_store %arg13[%c0_39, %97, %c0_40], %100 {strides = array<i32>} : memref<2x6x128xf32, #tpu.memory_space<vmem>>, vector<1x1x128xf32>,
    %101 = vector.extract_strided_slice %95 {offsets = [1, 0], sizes = [1, 128], strides = [1, 1]} : vector<2x128xf32> to vector<1x128xf32>
    %c1_41 = arith.constant 1 : index
    %102 = arith.index_cast %c1_i32 : i32 to index
    %c0_42 = arith.constant 0 : index
    %103 = vector.load %arg13[%c1_41, %102, %c0_42] : memref<2x6x128xf32, #tpu.memory_space<vmem>>, vector<1x1x128xf32>
    %104 = vector.shape_cast %103 : vector<1x1x128xf32> to vector<1x128xf32>
    %105 = vector.shape_cast %101 : vector<1x128xf32> to vector<1x1x128xf32>
    tpu.vector_store %arg13[%c1_41, %102, %c0_42], %105 {strides = array<i32>} : memref<2x6x128xf32, #tpu.memory_space<vmem>>, vector<1x1x128xf32>,
    %c2_i32 = arith.constant 2 : i32
    %c0_43 = arith.constant 0 : index
    %106 = arith.index_cast %c2_i32 : i32 to index
    %c0_44 = arith.constant 0 : index
    %107 = vector.load %arg12[%c0_43, %106, %c0_44] : memref<2x6x384xf32, #tpu.memory_space<vmem>>, vector<1x1x384xf32>
    %108 = vector.shape_cast %107 : vector<1x1x384xf32> to vector<1x384xf32>
    %c1_45 = arith.constant 1 : index
    %109 = arith.index_cast %c2_i32 : i32 to index
    %c0_46 = arith.constant 0 : index
    %110 = vector.load %arg12[%c1_45, %109, %c0_46] : memref<2x6x384xf32, #tpu.memory_space<vmem>>, vector<1x1x384xf32>
    %111 = vector.shape_cast %110 : vector<1x1x384xf32> to vector<1x384xf32>
    %112 = tpu.concatenate %108, %111 in 0 : vector<1x384xf32>, vector<1x384xf32> -> vector<2x384xf32>
    %cst_47 = arith.constant dense<0.000000e+00> : vector<2x384xf32>
    %113 = tpu.matmul %95, %16, %cst_47 {dimension_numbers = #tpu.dot_dimension_numbers<[1], [0], [0], [1], [0, 0, 1, 1], [], []>} : vector<2x128xf32>, vector<128x384xf32>, vector<2x384xf32> -> vector<2x384xf32>
    %114 = vector.extract_strided_slice %112 {offsets = [0, 0], sizes = [2, 128], strides = [1, 1]} : vector<2x384xf32> to vector<2x128xf32>
    %115 = vector.extract_strided_slice %113 {offsets = [0, 0], sizes = [2, 128], strides = [1, 1]} : vector<2x384xf32> to vector<2x128xf32>
    %116 = arith.addf %114, %115 : vector<2x128xf32>
    %117 = arith.negf %116 : vector<2x128xf32>
    %118 = math.exp %117 : vector<2x128xf32>
    %cst_48 = arith.constant 1.000000e+00 : f32
    %119 = vector.broadcast %cst_48 : f32 to vector<2x128xf32>
    %120 = arith.addf %119, %118 : vector<2x128xf32>
    %121 = arith.divf %119, %120 : vector<2x128xf32>
    %122 = vector.extract_strided_slice %112 {offsets = [0, 128], sizes = [2, 128], strides = [1, 1]} : vector<2x384xf32> to vector<2x128xf32>
    %123 = vector.extract_strided_slice %113 {offsets = [0, 128], sizes = [2, 128], strides = [1, 1]} : vector<2x384xf32> to vector<2x128xf32>
    %124 = arith.addf %122, %123 : vector<2x128xf32>
    %125 = arith.negf %124 : vector<2x128xf32>
    %126 = math.exp %125 : vector<2x128xf32>
    %cst_49 = arith.constant 1.000000e+00 : f32
    %127 = vector.broadcast %cst_49 : f32 to vector<2x128xf32>
    %128 = arith.addf %127, %126 : vector<2x128xf32>
    %129 = arith.divf %127, %128 : vector<2x128xf32>
    %130 = vector.extract_strided_slice %112 {offsets = [0, 256], sizes = [2, 128], strides = [1, 1]} : vector<2x384xf32> to vector<2x128xf32>
    %131 = vector.extract_strided_slice %113 {offsets = [0, 256], sizes = [2, 128], strides = [1, 1]} : vector<2x384xf32> to vector<2x128xf32>
    %132 = arith.mulf %121, %131 : vector<2x128xf32>
    %133 = arith.addf %130, %132 : vector<2x128xf32>
    %134 = math.tanh %133 : vector<2x128xf32>
    %cst_50 = arith.constant 1.000000e+00 : f32
    %135 = vector.broadcast %cst_50 : f32 to vector<2x128xf32>
    %136 = arith.subf %135, %129 : vector<2x128xf32>
    %137 = arith.mulf %136, %134 : vector<2x128xf32>
    %138 = arith.mulf %129, %95 : vector<2x128xf32>
    %139 = arith.addf %137, %138 : vector<2x128xf32>
    %140 = vector.extract_strided_slice %139 {offsets = [0, 0], sizes = [1, 128], strides = [1, 1]} : vector<2x128xf32> to vector<1x128xf32>
    %c0_51 = arith.constant 0 : index
    %141 = arith.index_cast %c2_i32 : i32 to index
    %c0_52 = arith.constant 0 : index
    %142 = vector.load %arg13[%c0_51, %141, %c0_52] : memref<2x6x128xf32, #tpu.memory_space<vmem>>, vector<1x1x128xf32>
    %143 = vector.shape_cast %142 : vector<1x1x128xf32> to vector<1x128xf32>
    %144 = vector.shape_cast %140 : vector<1x128xf32> to vector<1x1x128xf32>
    tpu.vector_store %arg13[%c0_51, %141, %c0_52], %144 {strides = array<i32>} : memref<2x6x128xf32, #tpu.memory_space<vmem>>, vector<1x1x128xf32>,
    %145 = vector.extract_strided_slice %139 {offsets = [1, 0], sizes = [1, 128], strides = [1, 1]} : vector<2x128xf32> to vector<1x128xf32>
    %c1_53 = arith.constant 1 : index
    %146 = arith.index_cast %c2_i32 : i32 to index
    %c0_54 = arith.constant 0 : index
    %147 = vector.load %arg13[%c1_53, %146, %c0_54] : memref<2x6x128xf32, #tpu.memory_space<vmem>>, vector<1x1x128xf32>
    %148 = vector.shape_cast %147 : vector<1x1x128xf32> to vector<1x128xf32>
    %149 = vector.shape_cast %145 : vector<1x128xf32> to vector<1x1x128xf32>
    tpu.vector_store %arg13[%c1_53, %146, %c0_54], %149 {strides = array<i32>} : memref<2x6x128xf32, #tpu.memory_space<vmem>>, vector<1x1x128xf32>,
    %c3_i32 = arith.constant 3 : i32
    %c0_55 = arith.constant 0 : index
    %150 = arith.index_cast %c3_i32 : i32 to index
    %c0_56 = arith.constant 0 : index
    %151 = vector.load %arg12[%c0_55, %150, %c0_56] : memref<2x6x384xf32, #tpu.memory_space<vmem>>, vector<1x1x384xf32>
    %152 = vector.shape_cast %151 : vector<1x1x384xf32> to vector<1x384xf32>
    %c1_57 = arith.constant 1 : index
    %153 = arith.index_cast %c3_i32 : i32 to index
    %c0_58 = arith.constant 0 : index
    %154 = vector.load %arg12[%c1_57, %153, %c0_58] : memref<2x6x384xf32, #tpu.memory_space<vmem>>, vector<1x1x384xf32>
    %155 = vector.shape_cast %154 : vector<1x1x384xf32> to vector<1x384xf32>
    %156 = tpu.concatenate %152, %155 in 0 : vector<1x384xf32>, vector<1x384xf32> -> vector<2x384xf32>
    %cst_59 = arith.constant dense<0.000000e+00> : vector<2x384xf32>
    %157 = tpu.matmul %139, %16, %cst_59 {dimension_numbers = #tpu.dot_dimension_numbers<[1], [0], [0], [1], [0, 0, 1, 1], [], []>} : vector<2x128xf32>, vector<128x384xf32>, vector<2x384xf32> -> vector<2x384xf32>
    %158 = vector.extract_strided_slice %156 {offsets = [0, 0], sizes = [2, 128], strides = [1, 1]} : vector<2x384xf32> to vector<2x128xf32>
    %159 = vector.extract_strided_slice %157 {offsets = [0, 0], sizes = [2, 128], strides = [1, 1]} : vector<2x384xf32> to vector<2x128xf32>
    %160 = arith.addf %158, %159 : vector<2x128xf32>
    %161 = arith.negf %160 : vector<2x128xf32>
    %162 = math.exp %161 : vector<2x128xf32>
    %cst_60 = arith.constant 1.000000e+00 : f32
    %163 = vector.broadcast %cst_60 : f32 to vector<2x128xf32>
    %164 = arith.addf %163, %162 : vector<2x128xf32>
    %165 = arith.divf %163, %164 : vector<2x128xf32>
    %166 = vector.extract_strided_slice %156 {offsets = [0, 128], sizes = [2, 128], strides = [1, 1]} : vector<2x384xf32> to vector<2x128xf32>
    %167 = vector.extract_strided_slice %157 {offsets = [0, 128], sizes = [2, 128], strides = [1, 1]} : vector<2x384xf32> to vector<2x128xf32>
    %168 = arith.addf %166, %167 : vector<2x128xf32>
    %169 = arith.negf %168 : vector<2x128xf32>
    %170 = math.exp %169 : vector<2x128xf32>
    %cst_61 = arith.constant 1.000000e+00 : f32
    %171 = vector.broadcast %cst_61 : f32 to vector<2x128xf32>
    %172 = arith.addf %171, %170 : vector<2x128xf32>
    %173 = arith.divf %171, %172 : vector<2x128xf32>
    %174 = vector.extract_strided_slice %156 {offsets = [0, 256], sizes = [2, 128], strides = [1, 1]} : vector<2x384xf32> to vector<2x128xf32>
    %175 = vector.extract_strided_slice %157 {offsets = [0, 256], sizes = [2, 128], strides = [1, 1]} : vector<2x384xf32> to vector<2x128xf32>
    %176 = arith.mulf %165, %175 : vector<2x128xf32>
    %177 = arith.addf %174, %176 : vector<2x128xf32>
    %178 = math.tanh %177 : vector<2x128xf32>
    %cst_62 = arith.constant 1.000000e+00 : f32
    %179 = vector.broadcast %cst_62 : f32 to vector<2x128xf32>
    %180 = arith.subf %179, %173 : vector<2x128xf32>
    %181 = arith.mulf %180, %178 : vector<2x128xf32>
    %182 = arith.mulf %173, %139 : vector<2x128xf32>
    %183 = arith.addf %181, %182 : vector<2x128xf32>
    %184 = vector.extract_strided_slice %183 {offsets = [0, 0], sizes = [1, 128], strides = [1, 1]} : vector<2x128xf32> to vector<1x128xf32>
    %c0_63 = arith.constant 0 : index
    %185 = arith.index_cast %c3_i32 : i32 to index
    %c0_64 = arith.constant 0 : index
    %186 = vector.load %arg13[%c0_63, %185, %c0_64] : memref<2x6x128xf32, #tpu.memory_space<vmem>>, vector<1x1x128xf32>
    %187 = vector.shape_cast %186 : vector<1x1x128xf32> to vector<1x128xf32>
    %188 = vector.shape_cast %184 : vector<1x128xf32> to vector<1x1x128xf32>
    tpu.vector_store %arg13[%c0_63, %185, %c0_64], %188 {strides = array<i32>} : memref<2x6x128xf32, #tpu.memory_space<vmem>>, vector<1x1x128xf32>,
    %189 = vector.extract_strided_slice %183 {offsets = [1, 0], sizes = [1, 128], strides = [1, 1]} : vector<2x128xf32> to vector<1x128xf32>
    %c1_65 = arith.constant 1 : index
    %190 = arith.index_cast %c3_i32 : i32 to index
    %c0_66 = arith.constant 0 : index
    %191 = vector.load %arg13[%c1_65, %190, %c0_66] : memref<2x6x128xf32, #tpu.memory_space<vmem>>, vector<1x1x128xf32>
    %192 = vector.shape_cast %191 : vector<1x1x128xf32> to vector<1x128xf32>
    %193 = vector.shape_cast %189 : vector<1x128xf32> to vector<1x1x128xf32>
    tpu.vector_store %arg13[%c1_65, %190, %c0_66], %193 {strides = array<i32>} : memref<2x6x128xf32, #tpu.memory_space<vmem>>, vector<1x1x128xf32>,
    %c4_i32 = arith.constant 4 : i32
    %c0_67 = arith.constant 0 : index
    %194 = arith.index_cast %c4_i32 : i32 to index
    %c0_68 = arith.constant 0 : index
    %195 = vector.load %arg12[%c0_67, %194, %c0_68] : memref<2x6x384xf32, #tpu.memory_space<vmem>>, vector<1x1x384xf32>
    %196 = vector.shape_cast %195 : vector<1x1x384xf32> to vector<1x384xf32>
    %c1_69 = arith.constant 1 : index
    %197 = arith.index_cast %c4_i32 : i32 to index
    %c0_70 = arith.constant 0 : index
    %198 = vector.load %arg12[%c1_69, %197, %c0_70] : memref<2x6x384xf32, #tpu.memory_space<vmem>>, vector<1x1x384xf32>
    %199 = vector.shape_cast %198 : vector<1x1x384xf32> to vector<1x384xf32>
    %200 = tpu.concatenate %196, %199 in 0 : vector<1x384xf32>, vector<1x384xf32> -> vector<2x384xf32>
    %cst_71 = arith.constant dense<0.000000e+00> : vector<2x384xf32>
    %201 = tpu.matmul %183, %16, %cst_71 {dimension_numbers = #tpu.dot_dimension_numbers<[1], [0], [0], [1], [0, 0, 1, 1], [], []>} : vector<2x128xf32>, vector<128x384xf32>, vector<2x384xf32> -> vector<2x384xf32>
    %202 = vector.extract_strided_slice %200 {offsets = [0, 0], sizes = [2, 128], strides = [1, 1]} : vector<2x384xf32> to vector<2x128xf32>
    %203 = vector.extract_strided_slice %201 {offsets = [0, 0], sizes = [2, 128], strides = [1, 1]} : vector<2x384xf32> to vector<2x128xf32>
    %204 = arith.addf %202, %203 : vector<2x128xf32>
    %205 = arith.negf %204 : vector<2x128xf32>
    %206 = math.exp %205 : vector<2x128xf32>
    %cst_72 = arith.constant 1.000000e+00 : f32
    %207 = vector.broadcast %cst_72 : f32 to vector<2x128xf32>
    %208 = arith.addf %207, %206 : vector<2x128xf32>
    %209 = arith.divf %207, %208 : vector<2x128xf32>
    %210 = vector.extract_strided_slice %200 {offsets = [0, 128], sizes = [2, 128], strides = [1, 1]} : vector<2x384xf32> to vector<2x128xf32>
    %211 = vector.extract_strided_slice %201 {offsets = [0, 128], sizes = [2, 128], strides = [1, 1]} : vector<2x384xf32> to vector<2x128xf32>
    %212 = arith.addf %210, %211 : vector<2x128xf32>
    %213 = arith.negf %212 : vector<2x128xf32>
    %214 = math.exp %213 : vector<2x128xf32>
    %cst_73 = arith.constant 1.000000e+00 : f32
    %215 = vector.broadcast %cst_73 : f32 to vector<2x128xf32>
    %216 = arith.addf %215, %214 : vector<2x128xf32>
    %217 = arith.divf %215, %216 : vector<2x128xf32>
    %218 = vector.extract_strided_slice %200 {offsets = [0, 256], sizes = [2, 128], strides = [1, 1]} : vector<2x384xf32> to vector<2x128xf32>
    %219 = vector.extract_strided_slice %201 {offsets = [0, 256], sizes = [2, 128], strides = [1, 1]} : vector<2x384xf32> to vector<2x128xf32>
    %220 = arith.mulf %209, %219 : vector<2x128xf32>
    %221 = arith.addf %218, %220 : vector<2x128xf32>
    %222 = math.tanh %221 : vector<2x128xf32>
    %cst_74 = arith.constant 1.000000e+00 : f32
    %223 = vector.broadcast %cst_74 : f32 to vector<2x128xf32>
    %224 = arith.subf %223, %217 : vector<2x128xf32>
    %225 = arith.mulf %224, %222 : vector<2x128xf32>
    %226 = arith.mulf %217, %183 : vector<2x128xf32>
    %227 = arith.addf %225, %226 : vector<2x128xf32>
    %228 = vector.extract_strided_slice %227 {offsets = [0, 0], sizes = [1, 128], strides = [1, 1]} : vector<2x128xf32> to vector<1x128xf32>
    %c0_75 = arith.constant 0 : index
    %229 = arith.index_cast %c4_i32 : i32 to index
    %c0_76 = arith.constant 0 : index
    %230 = vector.load %arg13[%c0_75, %229, %c0_76] : memref<2x6x128xf32, #tpu.memory_space<vmem>>, vector<1x1x128xf32>
    %231 = vector.shape_cast %230 : vector<1x1x128xf32> to vector<1x128xf32>
    %232 = vector.shape_cast %228 : vector<1x128xf32> to vector<1x1x128xf32>
    tpu.vector_store %arg13[%c0_75, %229, %c0_76], %232 {strides = array<i32>} : memref<2x6x128xf32, #tpu.memory_space<vmem>>, vector<1x1x128xf32>,
    %233 = vector.extract_strided_slice %227 {offsets = [1, 0], sizes = [1, 128], strides = [1, 1]} : vector<2x128xf32> to vector<1x128xf32>
    %c1_77 = arith.constant 1 : index
    %234 = arith.index_cast %c4_i32 : i32 to index
    %c0_78 = arith.constant 0 : index
    %235 = vector.load %arg13[%c1_77, %234, %c0_78] : memref<2x6x128xf32, #tpu.memory_space<vmem>>, vector<1x1x128xf32>
    %236 = vector.shape_cast %235 : vector<1x1x128xf32> to vector<1x128xf32>
    %237 = vector.shape_cast %233 : vector<1x128xf32> to vector<1x1x128xf32>
    tpu.vector_store %arg13[%c1_77, %234, %c0_78], %237 {strides = array<i32>} : memref<2x6x128xf32, #tpu.memory_space<vmem>>, vector<1x1x128xf32>,
    %c5_i32 = arith.constant 5 : i32
    %c0_79 = arith.constant 0 : index
    %238 = arith.index_cast %c5_i32 : i32 to index
    %c0_80 = arith.constant 0 : index
    %239 = vector.load %arg12[%c0_79, %238, %c0_80] : memref<2x6x384xf32, #tpu.memory_space<vmem>>, vector<1x1x384xf32>
    %240 = vector.shape_cast %239 : vector<1x1x384xf32> to vector<1x384xf32>
    %c1_81 = arith.constant 1 : index
    %241 = arith.index_cast %c5_i32 : i32 to index
    %c0_82 = arith.constant 0 : index
    %242 = vector.load %arg12[%c1_81, %241, %c0_82] : memref<2x6x384xf32, #tpu.memory_space<vmem>>, vector<1x1x384xf32>
    %243 = vector.shape_cast %242 : vector<1x1x384xf32> to vector<1x384xf32>
    %244 = tpu.concatenate %240, %243 in 0 : vector<1x384xf32>, vector<1x384xf32> -> vector<2x384xf32>
    %cst_83 = arith.constant dense<0.000000e+00> : vector<2x384xf32>
    %245 = tpu.matmul %227, %16, %cst_83 {dimension_numbers = #tpu.dot_dimension_numbers<[1], [0], [0], [1], [0, 0, 1, 1], [], []>} : vector<2x128xf32>, vector<128x384xf32>, vector<2x384xf32> -> vector<2x384xf32>
    %246 = vector.extract_strided_slice %244 {offsets = [0, 0], sizes = [2, 128], strides = [1, 1]} : vector<2x384xf32> to vector<2x128xf32>
    %247 = vector.extract_strided_slice %245 {offsets = [0, 0], sizes = [2, 128], strides = [1, 1]} : vector<2x384xf32> to vector<2x128xf32>
    %248 = arith.addf %246, %247 : vector<2x128xf32>
    %249 = arith.negf %248 : vector<2x128xf32>
    %250 = math.exp %249 : vector<2x128xf32>
    %cst_84 = arith.constant 1.000000e+00 : f32
    %251 = vector.broadcast %cst_84 : f32 to vector<2x128xf32>
    %252 = arith.addf %251, %250 : vector<2x128xf32>
    %253 = arith.divf %251, %252 : vector<2x128xf32>
    %254 = vector.extract_strided_slice %244 {offsets = [0, 128], sizes = [2, 128], strides = [1, 1]} : vector<2x384xf32> to vector<2x128xf32>
    %255 = vector.extract_strided_slice %245 {offsets = [0, 128], sizes = [2, 128], strides = [1, 1]} : vector<2x384xf32> to vector<2x128xf32>
    %256 = arith.addf %254, %255 : vector<2x128xf32>
    %257 = arith.negf %256 : vector<2x128xf32>
    %258 = math.exp %257 : vector<2x128xf32>
    %cst_85 = arith.constant 1.000000e+00 : f32
    %259 = vector.broadcast %cst_85 : f32 to vector<2x128xf32>
    %260 = arith.addf %259, %258 : vector<2x128xf32>
    %261 = arith.divf %259, %260 : vector<2x128xf32>
    %262 = vector.extract_strided_slice %244 {offsets = [0, 256], sizes = [2, 128], strides = [1, 1]} : vector<2x384xf32> to vector<2x128xf32>
    %263 = vector.extract_strided_slice %245 {offsets = [0, 256], sizes = [2, 128], strides = [1, 1]} : vector<2x384xf32> to vector<2x128xf32>
    %264 = arith.mulf %253, %263 : vector<2x128xf32>
    %265 = arith.addf %262, %264 : vector<2x128xf32>
    %266 = math.tanh %265 : vector<2x128xf32>
    %cst_86 = arith.constant 1.000000e+00 : f32
    %267 = vector.broadcast %cst_86 : f32 to vector<2x128xf32>
    %268 = arith.subf %267, %261 : vector<2x128xf32>
    %269 = arith.mulf %268, %266 : vector<2x128xf32>
    %270 = arith.mulf %261, %227 : vector<2x128xf32>
    %271 = arith.addf %269, %270 : vector<2x128xf32>
    %272 = vector.extract_strided_slice %271 {offsets = [0, 0], sizes = [1, 128], strides = [1, 1]} : vector<2x128xf32> to vector<1x128xf32>
    %c0_87 = arith.constant 0 : index
    %273 = arith.index_cast %c5_i32 : i32 to index
    %c0_88 = arith.constant 0 : index
    %274 = vector.load %arg13[%c0_87, %273, %c0_88] : memref<2x6x128xf32, #tpu.memory_space<vmem>>, vector<1x1x128xf32>
    %275 = vector.shape_cast %274 : vector<1x1x128xf32> to vector<1x128xf32>
    %276 = vector.shape_cast %272 : vector<1x128xf32> to vector<1x1x128xf32>
    tpu.vector_store %arg13[%c0_87, %273, %c0_88], %276 {strides = array<i32>} : memref<2x6x128xf32, #tpu.memory_space<vmem>>, vector<1x1x128xf32>,
    %277 = vector.extract_strided_slice %271 {offsets = [1, 0], sizes = [1, 128], strides = [1, 1]} : vector<2x128xf32> to vector<1x128xf32>
    %c1_89 = arith.constant 1 : index
    %278 = arith.index_cast %c5_i32 : i32 to index
    %c0_90 = arith.constant 0 : index
    %279 = vector.load %arg13[%c1_89, %278, %c0_90] : memref<2x6x128xf32, #tpu.memory_space<vmem>>, vector<1x1x128xf32>
    %280 = vector.shape_cast %279 : vector<1x1x128xf32> to vector<1x128xf32>
    %281 = vector.shape_cast %277 : vector<1x128xf32> to vector<1x1x128xf32>
    tpu.vector_store %arg13[%c1_89, %278, %c0_90], %281 {strides = array<i32>} : memref<2x6x128xf32, #tpu.memory_space<vmem>>, vector<1x1x128xf32>,
    %c6_i32 = arith.constant 6 : i32
    %c0_91 = arith.constant 0 : index
    %c0_92 = arith.constant 0 : index
    %282 = vector.load %arg11[%c0_91, %c0_92] : memref<2x128xf32, #tpu.memory_space<vmem>>, vector<2x128xf32>
    tpu.vector_store %arg11[%c0_91, %c0_92], %271 {strides = array<i32>} : memref<2x128xf32, #tpu.memory_space<vmem>>, vector<2x128xf32>,
    %c0_i32_93 = arith.constant 0 : i32
    %283 = arith.cmpi eq, %arg0, %c0_i32_93 : i32
    %284 = arith.extui %283 : i1 to i32
    %c0_i32_94 = arith.constant 0 : i32
    %285 = arith.cmpi ne, %284, %c0_i32_94 : i32
    scf.if %285 {
      %c0_127 = arith.constant 0 : index
      %c0_128 = arith.constant 0 : index
      %346 = vector.load %arg10[%c0_127, %c0_128] : memref<2x128xf32, #tpu.memory_space<vmem>>, vector<2x128xf32>
      tpu.vector_store %arg10[%c0_127, %c0_128], %271 {strides = array<i32>} : memref<2x128xf32, #tpu.memory_space<vmem>>, vector<2x128xf32>,
    } else {
    }
    %c0_95 = arith.constant 0 : index
    %c0_96 = arith.constant 0 : index
    %286 = vector.load %arg5[%c0_95, %c0_96] : memref<128x64xf32, #tpu.memory_space<vmem>>, vector<128x64xf32>
    %c0_97 = arith.constant 0 : index
    %c0_98 = arith.constant 0 : index
    %287 = vector.load %arg6[%c0_97, %c0_98] : memref<1x64xf32, #tpu.memory_space<vmem>>, vector<1x64xf32>
    %c0_99 = arith.constant 0 : index
    %c0_100 = arith.constant 0 : index
    %288 = vector.load %arg7[%c0_99, %c0_100] : memref<1x64xf32, #tpu.memory_space<vmem>>, vector<1x64xf32>
    %c0_101 = arith.constant 0 : index
    %c0_102 = arith.constant 0 : index
    %289 = vector.load %arg8[%c0_101, %c0_102] : memref<1x64xf32, #tpu.memory_space<vmem>>, vector<1x64xf32>
    %c0_103 = arith.constant 0 : index
    %c0_104 = arith.constant 0 : index
    %c0_105 = arith.constant 0 : index
    %290 = vector.load %arg13[%c0_103, %c0_104, %c0_105] : memref<2x6x128xf32, #tpu.memory_space<vmem>>, vector<1x6x128xf32>
    %291 = vector.shape_cast %290 : vector<1x6x128xf32> to vector<6x128xf32>
    %cst_106 = arith.constant dense<0.000000e+00> : vector<6x64xf32>
    %292 = tpu.matmul %291, %286, %cst_106 {dimension_numbers = #tpu.dot_dimension_numbers<[1], [0], [0], [1], [0, 0, 1, 1], [], []>} : vector<6x128xf32>, vector<128x64xf32>, vector<6x64xf32> -> vector<6x64xf32>
    %293 = vector.broadcast %287 : vector<1x64xf32> to vector<6x64xf32>
    %294 = arith.addf %292, %293 : vector<6x64xf32>
    %cst_107 = arith.constant dense<0.000000e+00> : vector<6xf32>
    %295 = vector.multi_reduction <add>, %294, %cst_107 [1] : vector<6x64xf32> to vector<6xf32>
    %296 = vector.shape_cast %295 : vector<6xf32> to vector<6x1xf32>
    %cst_108 = arith.constant 1.562500e-02 : f32
    %297 = vector.broadcast %cst_108 : f32 to vector<6x1xf32>
    %298 = arith.mulf %296, %297 : vector<6x1xf32>
    %299 = vector.broadcast %298 : vector<6x1xf32> to vector<6x64xf32>
    %300 = arith.subf %294, %299 : vector<6x64xf32>
    %301 = arith.mulf %300, %300 : vector<6x64xf32>
    %cst_109 = arith.constant dense<0.000000e+00> : vector<6xf32>
    %302 = vector.multi_reduction <add>, %301, %cst_109 [1] : vector<6x64xf32> to vector<6xf32>
    %303 = vector.shape_cast %302 : vector<6xf32> to vector<6x1xf32>
    %cst_110 = arith.constant 1.562500e-02 : f32
    %304 = vector.broadcast %cst_110 : f32 to vector<6x1xf32>
    %305 = arith.mulf %303, %304 : vector<6x1xf32>
    %cst_111 = arith.constant 9.99999974E-6 : f32
    %306 = vector.broadcast %cst_111 : f32 to vector<6x1xf32>
    %307 = arith.addf %305, %306 : vector<6x1xf32>
    %308 = math.rsqrt %307 : vector<6x1xf32>
    %309 = vector.broadcast %308 : vector<6x1xf32> to vector<6x64xf32>
    %310 = arith.mulf %300, %309 : vector<6x64xf32>
    %311 = vector.broadcast %288 : vector<1x64xf32> to vector<6x64xf32>
    %312 = arith.mulf %310, %311 : vector<6x64xf32>
    %313 = vector.broadcast %289 : vector<1x64xf32> to vector<6x64xf32>
    %314 = arith.addf %312, %313 : vector<6x64xf32>
    %c0_112 = arith.constant 0 : index
    %c0_113 = arith.constant 0 : index
    %c0_114 = arith.constant 0 : index
    %315 = vector.load %arg9[%c0_112, %c0_113, %c0_114] : memref<2x6x64xf32, #tpu.memory_space<vmem>>, vector<1x6x64xf32>
    %316 = vector.shape_cast %315 : vector<1x6x64xf32> to vector<6x64xf32>
    %317 = vector.shape_cast %314 : vector<6x64xf32> to vector<1x6x64xf32>
    tpu.vector_store %arg9[%c0_112, %c0_113, %c0_114], %317 {strides = array<i32>} : memref<2x6x64xf32, #tpu.memory_space<vmem>>, vector<1x6x64xf32>,
    %c1_115 = arith.constant 1 : index
    %c0_116 = arith.constant 0 : index
    %c0_117 = arith.constant 0 : index
    %318 = vector.load %arg13[%c1_115, %c0_116, %c0_117] : memref<2x6x128xf32, #tpu.memory_space<vmem>>, vector<1x6x128xf32>
    %319 = vector.shape_cast %318 : vector<1x6x128xf32> to vector<6x128xf32>
    %cst_118 = arith.constant dense<0.000000e+00> : vector<6x64xf32>
    %320 = tpu.matmul %319, %286, %cst_118 {dimension_numbers = #tpu.dot_dimension_numbers<[1], [0], [0], [1], [0, 0, 1, 1], [], []>} : vector<6x128xf32>, vector<128x64xf32>, vector<6x64xf32> -> vector<6x64xf32>
    %321 = vector.broadcast %287 : vector<1x64xf32> to vector<6x64xf32>
    %322 = arith.addf %320, %321 : vector<6x64xf32>
    %cst_119 = arith.constant dense<0.000000e+00> : vector<6xf32>
    %323 = vector.multi_reduction <add>, %322, %cst_119 [1] : vector<6x64xf32> to vector<6xf32>
    %324 = vector.shape_cast %323 : vector<6xf32> to vector<6x1xf32>
    %cst_120 = arith.constant 1.562500e-02 : f32
    %325 = vector.broadcast %cst_120 : f32 to vector<6x1xf32>
    %326 = arith.mulf %324, %325 : vector<6x1xf32>
    %327 = vector.broadcast %326 : vector<6x1xf32> to vector<6x64xf32>
    %328 = arith.subf %322, %327 : vector<6x64xf32>
    %329 = arith.mulf %328, %328 : vector<6x64xf32>
    %cst_121 = arith.constant dense<0.000000e+00> : vector<6xf32>
    %330 = vector.multi_reduction <add>, %329, %cst_121 [1] : vector<6x64xf32> to vector<6xf32>
    %331 = vector.shape_cast %330 : vector<6xf32> to vector<6x1xf32>
    %cst_122 = arith.constant 1.562500e-02 : f32
    %332 = vector.broadcast %cst_122 : f32 to vector<6x1xf32>
    %333 = arith.mulf %331, %332 : vector<6x1xf32>
    %cst_123 = arith.constant 9.99999974E-6 : f32
    %334 = vector.broadcast %cst_123 : f32 to vector<6x1xf32>
    %335 = arith.addf %333, %334 : vector<6x1xf32>
    %336 = math.rsqrt %335 : vector<6x1xf32>
    %337 = vector.broadcast %336 : vector<6x1xf32> to vector<6x64xf32>
    %338 = arith.mulf %328, %337 : vector<6x64xf32>
    %339 = vector.broadcast %288 : vector<1x64xf32> to vector<6x64xf32>
    %340 = arith.mulf %338, %339 : vector<6x64xf32>
    %341 = vector.broadcast %289 : vector<1x64xf32> to vector<6x64xf32>
    %342 = arith.addf %340, %341 : vector<6x64xf32>
    %c1_124 = arith.constant 1 : index
    %c0_125 = arith.constant 0 : index
    %c0_126 = arith.constant 0 : index
    %343 = vector.load %arg9[%c1_124, %c0_125, %c0_126] : memref<2x6x64xf32, #tpu.memory_space<vmem>>, vector<1x6x64xf32>
    %344 = vector.shape_cast %343 : vector<1x6x64xf32> to vector<6x64xf32>
    %345 = vector.shape_cast %342 : vector<6x64xf32> to vector<1x6x64xf32>
    tpu.vector_store %arg9[%c1_124, %c0_125, %c0_126], %345 {strides = array<i32>} : memref<2x6x64xf32, #tpu.memory_space<vmem>>, vector<1x6x64xf32>,
    return
  }
  func.func @transform_0(%arg0: i32) -> (i32, i32, i32) {
    %c0_i32 = arith.constant 0 : i32
    %c0_i32_0 = arith.constant 0 : i32
    %c0_i32_1 = arith.constant 0 : i32
    return %c0_i32, %arg0, %c0_i32_0 : i32, i32, i32
  }
  func.func @transform_1(%arg0: i32) -> (i32, i32) {
    %c0_i32 = arith.constant 0 : i32
    %c0_i32_0 = arith.constant 0 : i32
    %c0_i32_1 = arith.constant 0 : i32
    return %c0_i32, %c0_i32_0 : i32, i32
  }
  func.func @transform_2(%arg0: i32) -> (i32, i32) {
    %c0_i32 = arith.constant 0 : i32
    %c0_i32_0 = arith.constant 0 : i32
    %c0_i32_1 = arith.constant 0 : i32
    return %c0_i32, %c0_i32_0 : i32, i32
  }
  func.func @transform_3(%arg0: i32) -> (i32, i32) {
    %c0_i32 = arith.constant 0 : i32
    %c0_i32_0 = arith.constant 0 : i32
    %c0_i32_1 = arith.constant 0 : i32
    return %c0_i32, %c0_i32_0 : i32, i32
  }
  func.func @transform_4(%arg0: i32) -> (i32, i32) {
    %c0_i32 = arith.constant 0 : i32
    %c0_i32_0 = arith.constant 0 : i32
    %c0_i32_1 = arith.constant 0 : i32
    return %c0_i32, %c0_i32_0 : i32, i32
  }
  func.func @transform_5(%arg0: i32) -> (i32, i32) {
    %c0_i32 = arith.constant 0 : i32
    %c0_i32_0 = arith.constant 0 : i32
    %c0_i32_1 = arith.constant 0 : i32
    return %c0_i32, %c0_i32_0 : i32, i32
  }
  func.func @transform_6(%arg0: i32) -> (i32, i32) {
    %c0_i32 = arith.constant 0 : i32
    %c0_i32_0 = arith.constant 0 : i32
    %c0_i32_1 = arith.constant 0 : i32
    return %c0_i32, %c0_i32_0 : i32, i32
  }
  func.func @transform_7(%arg0: i32) -> (i32, i32) {
    %c0_i32 = arith.constant 0 : i32
    %c0_i32_0 = arith.constant 0 : i32
    %c0_i32_1 = arith.constant 0 : i32
    return %c0_i32, %c0_i32_0 : i32, i32
  }
  func.func @transform_8(%arg0: i32) -> (i32, i32, i32) {
    %c0_i32 = arith.constant 0 : i32
    %c0_i32_0 = arith.constant 0 : i32
    %c0_i32_1 = arith.constant 0 : i32
    return %c0_i32, %arg0, %c0_i32_0 : i32, i32, i32
  }
  func.func @transform_9(%arg0: i32) -> (i32, i32) {
    %c0_i32 = arith.constant 0 : i32
    %c0_i32_0 = arith.constant 0 : i32
    %c0_i32_1 = arith.constant 0 : i32
    return %c0_i32, %c0_i32_0 : i32, i32
  }
}

</mosaic_0001>

<llo_original>
// kernel: tpu_custom_call.1
$region0: #{tpu_custom_call.1}
  #allocation0 [shape = 'u32[]', space=smem, size = 0x4, offset = 0x4, fixed_abs, tag = 'smem constant byte address 0x4 - core index']
  #allocation1 [shape = 'u32[144,128]{1,0:T(1,128)}', space=vmem, size = 0x12000, scoped, tag = 'internal scratch']
  #allocation2 [shape = 'f32[2,128]{1,0:T(2,128)}', space=vmem, size = 0x400, scoped, tag = 'scratch operand']
  #allocation3 [shape = 'f32[2,6,384]{2,1,0:T(8,128)}', space=vmem, size = 0x6000, scoped, tag = 'scratch operand']
  #allocation4 [shape = 'f32[2,6,128]{2,1,0:T(8,128)}', space=vmem, size = 0x2000, scoped, tag = 'scratch operand']
  %s0 = inlined_call_operand.vmem [shape: f32[2,6,64], index: 0, kind: input, shape index: {}]
  %s1 = inlined_call_operand.vmem [shape: f32[64,384], index: 1, kind: input, shape index: {}]
  %s2 = inlined_call_operand.hbm [shape: f32[128,384], index: 2, kind: input, shape index: {}]
  %s3 = inlined_call_operand.vmem [shape: f32[2,128], index: 3, kind: input, shape index: {}]
  %s4 = inlined_call_operand.vmem [shape: f32[128,64], index: 4, kind: input, shape index: {}]
  %s5 = inlined_call_operand.vmem [shape: f32[1,64], index: 5, kind: input, shape index: {}]
  %s6 = inlined_call_operand.vmem [shape: f32[1,64], index: 6, kind: input, shape index: {}]
  %s7 = inlined_call_operand.vmem [shape: f32[1,64], index: 7, kind: input, shape index: {}]
  %s8 = inlined_call_operand.vmem [shape: f32[2,6,64], index: 8, kind: output, shape index: {0}]
  %s9 = inlined_call_operand.hbm [shape: f32[2,128], index: 9, kind: output, shape index: {1}]
  %10 = xla_tuple %s8, %s9
  %s11 = sld [smem:[#allocation0]]
  $region62: #{tpu_custom_call.1} parent=0
    _
  %s13 = ssub.s32 1, %s11
  %s14 = scalar_select 0, %s13, %s11
  $region1: #{tpu_custom_call.1} parent=0
    #allocation5 [shape = 'u8[196608]{0}', space=vmem, size = 0x30000, scoped, tag = 'input window, operand 2, single buffered']
    #allocation6 [shape = 's32[1]{0}', space=sflag, size = 0x4, scoped, tag = 'scoped memory for tpu_custom_call.1']
    #allocation7 [shape = 's32[1]{0}', space=sflag, size = 0x4, scoped, tag = 'scoped memory for tpu_custom_call.1']
    #allocation8 [shape = 'u8[1024]{0}', space=vmem, size = 0x400, scoped, tag = 'output window, operand 1, single buffered']
    %15 = vsyncpa [#allocation6], 0
    %16 = vsyncpa [#allocation7], 0
    // Predicated region
    $region2: #{tpu_custom_call.1} parent=1 // pred_check
      _
    $region3: #{tpu_custom_call.1} parent=1 // pred_check_branch
      %18 = sbr.rel (0) target = $region5
    $region4: #{tpu_custom_call.1} parent=1 // pred_region
      _
    $region5: #{tpu_custom_call.1} parent=1 // pred_fallthru
      _
    // Predicated region
    $region6: #{tpu_custom_call.1} parent=1 // pred_check
      _
    $region7: #{tpu_custom_call.1} parent=1 // pred_check_branch
      %20 = sbr.rel (0) target = $region9
    $region8: #{tpu_custom_call.1} parent=1 // pred_region
      _
    $region9: #{tpu_custom_call.1} parent=1 // pred_fallthru
      _
    // Predicated region
    $region10: #{tpu_custom_call.1} parent=1 // pred_check
      _
    $region11: #{tpu_custom_call.1} parent=1 // pred_check_branch
      %22 = sbr.rel (0) target = $region13
    $region12: #{tpu_custom_call.1} parent=1 // pred_region
      %s24 = ssub.s32 6144, 6144
      %25 = vsyncadd [#allocation6], %s24
      %s26 = sshll.u32 [#allocation5], 4
      %s27 = int_to_ptr.vmem [resolvable:$true] %s26
      %32 = dma.hbm_to_vmem [thread:$0]  %s2, 6144, %s27, [#allocation6], 384, 384, 24
    $region13: #{tpu_custom_call.1} parent=1 // pred_fallthru
      _
    // Predicated region
    $region14: #{tpu_custom_call.1} parent=1 // pred_check
      _
    $region15: #{tpu_custom_call.1} parent=1 // pred_check_branch
      %34 = sbr.rel (0) target = $region17
    $region16: #{tpu_custom_call.1} parent=1 // pred_region
      _
    $region17: #{tpu_custom_call.1} parent=1 // pred_fallthru
      _
    // Predicated region
    $region18: #{tpu_custom_call.1} parent=1 // pred_check
      _
    $region19: #{tpu_custom_call.1} parent=1 // pred_check_branch
      %36 = sbr.rel (0) target = $region21
    $region20: #{tpu_custom_call.1} parent=1 // pred_region
      _
    $region21: #{tpu_custom_call.1} parent=1 // pred_fallthru
      _
    // Predicated region
    $region22: #{tpu_custom_call.1} parent=1 // pred_check
      _
    $region23: #{tpu_custom_call.1} parent=1 // pred_check_branch
      %38 = sbr.rel (0) target = $region25
    $region24: #{tpu_custom_call.1} parent=1 // pred_region
      _
    $region25: #{tpu_custom_call.1} parent=1 // pred_fallthru
      _
    // Predicated region
    $region26: #{tpu_custom_call.1} parent=1 // pred_check
      _
    $region27: #{tpu_custom_call.1} parent=1 // pred_check_branch
      %40 = sbr.rel (0) target = $region29
    $region28: #{tpu_custom_call.1} parent=1 // pred_region
      _
    $region29: #{tpu_custom_call.1} parent=1 // pred_fallthru
      _
    // Predicated region
    $region30: #{tpu_custom_call.1} parent=1 // pred_check
      _
    $region31: #{tpu_custom_call.1} parent=1 // pred_check_branch
      %42 = sbr.rel (0) target = $region33
    $region32: #{tpu_custom_call.1} parent=1 // pred_region
      _
    $region33: #{tpu_custom_call.1} parent=1 // pred_fallthru
      _
    // Predicated region
    $region34: #{tpu_custom_call.1} parent=1 // pred_check
      _
    $region35: #{tpu_custom_call.1} parent=1 // pred_check_branch
      %44 = sbr.rel (0) target = $region37
    $region36: #{tpu_custom_call.1} parent=1 // pred_region
      %45 = dma.done [#allocation6], 6144
    $region37: #{tpu_custom_call.1} parent=1 // pred_fallthru
      _
    %p46 = scmp.eq.s32.totalorder 0, 0
    // Predicated region
    $region38: #{tpu_custom_call.1} parent=1 // pred_check
      %p47 = pneg %p46
    $region39: #{tpu_custom_call.1} parent=1 // pred_check_branch
      %49 = sbr.rel (%p47) target = $region41
    $region40: #{tpu_custom_call.1} parent=1 // pred_region
      %v50 = vld [vmem:[%s3] sm:$0x3]
      %51 = vst [vmem:[#allocation2] sm:$0x3] %v50
    $region41: #{tpu_custom_call.1} parent=1 // pred_fallthru
      _
    %v52 = vld [vmem:[%s1] sm:$0xff]
    %v53 = vld [vmem:[%s1 + $0x8] sm:$0xff]
    %v54 = vld [vmem:[%s1 + $0x10] sm:$0xff]
    %v55 = vld [vmem:[%s1 + $0x18] sm:$0xff]
    %v56 = vld [vmem:[%s1 + $0x20] sm:$0xff]
    %v57 = vld [vmem:[%s1 + $0x28] sm:$0xff]
    %v58 = vld [vmem:[%s1 + $0x30] sm:$0xff]
    %v59 = vld [vmem:[%s1 + $0x38] sm:$0xff]
    %v60 = vld [vmem:[%s1 + $0x40] sm:$0xff]
    %v61 = vld [vmem:[%s1 + $0x48] sm:$0xff]
    %v62 = vld [vmem:[%s1 + $0x50] sm:$0xff]
    %v63 = vld [vmem:[%s1 + $0x58] sm:$0xff]
    %v64 = vld [vmem:[%s1 + $0x60] sm:$0xff]
    %v65 = vld [vmem:[%s1 + $0x68] sm:$0xff]
    %v66 = vld [vmem:[%s1 + $0x70] sm:$0xff]
    %v67 = vld [vmem:[%s1 + $0x78] sm:$0xff]
    %v68 = vld [vmem:[%s1 + $0x80] sm:$0xff]
    %v69 = vld [vmem:[%s1 + $0x88] sm:$0xff]
    %v70 = vld [vmem:[%s1 + $0x90] sm:$0xff]
    %v71 = vld [vmem:[%s1 + $0x98] sm:$0xff]
    %v72 = vld [vmem:[%s1 + $0xa0] sm:$0xff]
    %v73 = vld [vmem:[%s1 + $0xa8] sm:$0xff]
    %v74 = vld [vmem:[%s1 + $0xb0] sm:$0xff]
    %v75 = vld [vmem:[%s1 + $0xb8] sm:$0xff]
    %v76 = vld [vmem:[%s0] sm:$0x3f]
    %vm77 = vcmask 523264
    %v79 = vsel %vm77, %v76, 0
    %81 = vmatprep.subr.mxu0 %v53
    %82 = vmatpush1.msra.mxu0 %v52
    %83 = vmatprep.subr.mxu0 %v56
    %84 = vmatpush1.msra.mxu0 %v55
    %85 = vmatprep.subr.mxu0 %v59
    %86 = vmatpush1.msra.mxu0 %v58
    %87 = vmatprep.subr.mxu0 %v62
    %88 = vmatpush1.msra.mxu0 %v61
    %89 = vmatprep.subr.mxu0 %v65
    %90 = vmatpush1.msra.mxu0 %v64
    %91 = vmatprep.subr.mxu0 %v68
    %92 = vmatpush1.msra.mxu0 %v67
    %93 = vmatprep.subr.mxu0 %v71
    %94 = vmatpush1.msra.mxu0 %v70
    %95 = vmatprep.subr.mxu0 %v74
    %96 = vmatpush1.msra.mxu0 %v73
    %97 = vmatprep.subr.mxu0 0.0
    %98 = vmatpush1.msra.mxu0 0.0
    %99 = vmatprep.subr.mxu0 0.0
    %100 = vmatpush1.msra.mxu0 0.0
    %101 = vmatprep.subr.mxu0 0.0
    %102 = vmatpush1.msra.mxu0 0.0
    %103 = vmatprep.subr.mxu0 0.0
    %104 = vmatpush1.msra.mxu0 0.0
    %105 = vmatprep.subr.mxu0 0.0
    %106 = vmatpush1.msra.mxu0 0.0
    %107 = vmatprep.subr.mxu0 0.0
    %108 = vmatpush1.msra.mxu0 0.0
    %109 = vmatprep.subr.mxu0 0.0
    %110 = vmatpush1.msra.mxu0 0.0
    %111 = vmatprep.subr.mxu0 0.0
    %112 = vmatpush1.msra.mxu0 0.0
    %113 = vmatprep.subr.mxu0 0.0
    %114 = vmatpush1.msra.mxu0 0.0
    %115 = vmatprep.subr.mxu0 0.0
    %116 = vmatpush1.msra.mxu0 0.0
    %117 = vmatprep.subr.mxu0 0.0
    %118 = vmatpush1.msra.mxu0 0.0
    %119 = vmatprep.subr.mxu0 0.0
    %120 = vmatpush1.msra.mxu0 0.0
    %121 = vmatprep.subr.mxu0 0.0
    %122 = vmatpush1.msra.mxu0 0.0
    %123 = vmatprep.subr.mxu0 0.0
    %124 = vmatpush1.msra.mxu0 0.0
    %125 = vmatprep.subr.mxu0 0.0
    %126 = vmatpush1.msra.mxu0 0.0
    %127 = vmatprep.subr.mxu0 0.0
    %128 = vmatpush1.msra.mxu0 0.0
    %129 = vmatprep.subr.mxu0 0.0
    %130 = vmatpush1.msra.mxu0 0.0
    %131 = vmatprep.subr.mxu0 0.0
    %132 = vmatpush1.msra.mxu0 0.0
    %133 = vmatprep.subr.mxu0 0.0
    %134 = vmatpush1.msra.mxu0 0.0
    %135 = vmatprep.subr.mxu0 0.0
    %136 = vmatpush1.msra.mxu0 0.0
    %137 = vmatprep.subr.mxu0 0.0
    %138 = vmatpush1.msra.mxu0 0.0
    %139 = vmatprep.subr.mxu0 0.0
    %140 = vmatpush1.msra.mxu0 0.0
    %141 = vmatprep.subr.mxu0 0.0
    %142 = vmatpush1.msra.mxu0 0.0
    %143 = vmatprep.subr.mxu0 0.0
    %144 = vmatpush1.msra.mxu0 0.0
    %145 = vmatprep.mubr.f32.mxu0 0.0
    %146 = vmatmul.mubr.f32.gmra.mrb[0].mxu0 %v79
    %v147 = vpop.f32.mrb[0].mxu0
    %v148 = vadd.f32 0.0, %v147
    %v149 = vpop.f32.mrb[0].mxu0
    %v150 = vadd.f32 0.0, %v149
    %151 = vdwg.mxu0
    %152 = vmatprep.subr.mxu0 0.0
    %153 = vmatpush1.msra.mxu0 %v54
    %154 = vmatprep.subr.mxu0 0.0
    %155 = vmatpush1.msra.mxu0 %v57
    %156 = vmatprep.subr.mxu0 0.0
    %157 = vmatpush1.msra.mxu0 %v60
    %158 = vmatprep.subr.mxu0 0.0
    %159 = vmatpush1.msra.mxu0 %v63
    %160 = vmatprep.subr.mxu0 0.0
    %161 = vmatpush1.msra.mxu0 %v66
    %162 = vmatprep.subr.mxu0 0.0
    %163 = vmatpush1.msra.mxu0 %v69
    %164 = vmatprep.subr.mxu0 0.0
    %165 = vmatpush1.msra.mxu0 %v72
    %166 = vmatprep.subr.mxu0 0.0
    %167 = vmatpush1.msra.mxu0 %v75
    %168 = vmatprep.subr.mxu0 0.0
    %169 = vmatpush1.msra.mxu0 0.0
    %170 = vmatprep.subr.mxu0 0.0
    %171 = vmatpush1.msra.mxu0 0.0
    %172 = vmatprep.subr.mxu0 0.0
    %173 = vmatpush1.msra.mxu0 0.0
    %174 = vmatprep.subr.mxu0 0.0
    %175 = vmatpush1.msra.mxu0 0.0
    %176 = vmatprep.subr.mxu0 0.0
    %177 = vmatpush1.msra.mxu0 0.0
    %178 = vmatprep.subr.mxu0 0.0
    %179 = vmatpush1.msra.mxu0 0.0
    %180 = vmatprep.subr.mxu0 0.0
    %181 = vmatpush1.msra.mxu0 0.0
    %182 = vmatprep.subr.mxu0 0.0
    %183 = vmatpush1.msra.mxu0 0.0
    %184 = vmatprep.subr.mxu0 0.0
    %185 = vmatpush1.msra.mxu0 0.0
    %186 = vmatprep.subr.mxu0 0.0
    %187 = vmatpush1.msra.mxu0 0.0
    %188 = vmatprep.subr.mxu0 0.0
    %189 = vmatpush1.msra.mxu0 0.0
    %190 = vmatprep.subr.mxu0 0.0
    %191 = vmatpush1.msra.mxu0 0.0
    %192 = vmatprep.subr.mxu0 0.0
    %193 = vmatpush1.msra.mxu0 0.0
    %194 = vmatprep.subr.mxu0 0.0
    %195 = vmatpush1.msra.mxu0 0.0
    %196 = vmatprep.subr.mxu0 0.0
    %197 = vmatpush1.msra.mxu0 0.0
    %198 = vmatprep.subr.mxu0 0.0
    %199 = vmatpush1.msra.mxu0 0.0
    %200 = vmatprep.subr.mxu0 0.0
    %201 = vmatpush1.msra.mxu0 0.0
    %202 = vmatprep.subr.mxu0 0.0
    %203 = vmatpush1.msra.mxu0 0.0
    %204 = vmatprep.subr.mxu0 0.0
    %205 = vmatpush1.msra.mxu0 0.0
    %206 = vmatprep.subr.mxu0 0.0
    %207 = vmatpush1.msra.mxu0 0.0
    %208 = vmatprep.subr.mxu0 0.0
    %209 = vmatpush1.msra.mxu0 0.0
    %210 = vmatprep.subr.mxu0 0.0
    %211 = vmatpush1.msra.mxu0 0.0
    %212 = vmatprep.subr.mxu0 0.0
    %213 = vmatpush1.msra.mxu0 0.0
    %214 = vmatprep.subr.mxu0 0.0
    %215 = vmatpush1.msra.mxu0 0.0
    %216 = vmatprep.mubr.f32.mxu0 0.0
    %217 = vmatmul.mubr.f32.gmra.mrb[0].mxu0 %v79
    %v218 = vpop.f32.mrb[0].mxu0
    %v219 = vadd.f32 0.0, %v218
    %v220 = vpop.f32.mrb[0].mxu0
    %221 = vdwg.mxu0
    %222 = vst [vmem:[#allocation3] sm:$0x3f] %v148
    %223 = vst [vmem:[#allocation3 + $0x8] sm:$0x3f] %v150
    %224 = vst [vmem:[#allocation3 + $0x10] sm:$0x3f] %v219
    %s225 = scalar_lea.vmem %s0, 8
    %v226 = vld [vmem:[%s225] sm:$0x3f]
    %v228 = vsel %vm77, %v226, 0
    %230 = vmatprep.subr.mxu0 %v53
    %231 = vmatpush1.msra.mxu0 %v52
    %232 = vmatprep.subr.mxu0 %v56
    %233 = vmatpush1.msra.mxu0 %v55
    %234 = vmatprep.subr.mxu0 %v59
    %235 = vmatpush1.msra.mxu0 %v58
    %236 = vmatprep.subr.mxu0 %v62
    %237 = vmatpush1.msra.mxu0 %v61
    %238 = vmatprep.subr.mxu0 %v65
    %239 = vmatpush1.msra.mxu0 %v64
    %240 = vmatprep.subr.mxu0 %v68
    %241 = vmatpush1.msra.mxu0 %v67
    %242 = vmatprep.subr.mxu0 %v71
    %243 = vmatpush1.msra.mxu0 %v70
    %244 = vmatprep.subr.mxu0 %v74
    %245 = vmatpush1.msra.mxu0 %v73
    %246 = vmatprep.subr.mxu0 0.0
    %247 = vmatpush1.msra.mxu0 0.0
    %248 = vmatprep.subr.mxu0 0.0
    %249 = vmatpush1.msra.mxu0 0.0
    %250 = vmatprep.subr.mxu0 0.0
    %251 = vmatpush1.msra.mxu0 0.0
    %252 = vmatprep.subr.mxu0 0.0
    %253 = vmatpush1.msra.mxu0 0.0
    %254 = vmatprep.subr.mxu0 0.0
    %255 = vmatpush1.msra.mxu0 0.0
    %256 = vmatprep.subr.mxu0 0.0
    %257 = vmatpush1.msra.mxu0 0.0
    %258 = vmatprep.subr.mxu0 0.0
    %259 = vmatpush1.msra.mxu0 0.0
    %260 = vmatprep.subr.mxu0 0.0
    %261 = vmatpush1.msra.mxu0 0.0
    %262 = vmatprep.subr.mxu0 0.0
    %263 = vmatpush1.msra.mxu0 0.0
    %264 = vmatprep.subr.mxu0 0.0
    %265 = vmatpush1.msra.mxu0 0.0
    %266 = vmatprep.subr.mxu0 0.0
    %267 = vmatpush1.msra.mxu0 0.0
    %268 = vmatprep.subr.mxu0 0.0
    %269 = vmatpush1.msra.mxu0 0.0
    %270 = vmatprep.subr.mxu0 0.0
    %271 = vmatpush1.msra.mxu0 0.0
    %272 = vmatprep.subr.mxu0 0.0
    %273 = vmatpush1.msra.mxu0 0.0
    %274 = vmatprep.subr.mxu0 0.0
    %275 = vmatpush1.msra.mxu0 0.0
    %276 = vmatprep.subr.mxu0 0.0
    %277 = vmatpush1.msra.mxu0 0.0
    %278 = vmatprep.subr.mxu0 0.0
    %279 = vmatpush1.msra.mxu0 0.0
    %280 = vmatprep.subr.mxu0 0.0
    %281 = vmatpush1.msra.mxu0 0.0
    %282 = vmatprep.subr.mxu0 0.0
    %283 = vmatpush1.msra.mxu0 0.0
    %284 = vmatprep.subr.mxu0 0.0
    %285 = vmatpush1.msra.mxu0 0.0
    %286 = vmatprep.subr.mxu0 0.0
    %287 = vmatpush1.msra.mxu0 0.0
    %288 = vmatprep.subr.mxu0 0.0
    %289 = vmatpush1.msra.mxu0 0.0
    %290 = vmatprep.subr.mxu0 0.0
    %291 = vmatpush1.msra.mxu0 0.0
    %292 = vmatprep.subr.mxu0 0.0
    %293 = vmatpush1.msra.mxu0 0.0
    %294 = vmatprep.mubr.f32.mxu0 0.0
    %295 = vmatmul.mubr.f32.gmra.mrb[0].mxu0 %v228
    %v296 = vpop.f32.mrb[0].mxu0
    %v297 = vadd.f32 0.0, %v296
    %v298 = vpop.f32.mrb[0].mxu0
    %v299 = vadd.f32 0.0, %v298
    %300 = vdwg.mxu0
    %301 = vmatprep.subr.mxu0 0.0
    %302 = vmatpush1.msra.mxu0 %v54
    %303 = vmatprep.subr.mxu0 0.0
    %304 = vmatpush1.msra.mxu0 %v57
    %305 = vmatprep.subr.mxu0 0.0
    %306 = vmatpush1.msra.mxu0 %v60
    %307 = vmatprep.subr.mxu0 0.0
    %308 = vmatpush1.msra.mxu0 %v63
    %309 = vmatprep.subr.mxu0 0.0
    %310 = vmatpush1.msra.mxu0 %v66
    %311 = vmatprep.subr.mxu0 0.0
    %312 = vmatpush1.msra.mxu0 %v69
    %313 = vmatprep.subr.mxu0 0.0
    %314 = vmatpush1.msra.mxu0 %v72
    %315 = vmatprep.subr.mxu0 0.0
    %316 = vmatpush1.msra.mxu0 %v75
    %317 = vmatprep.subr.mxu0 0.0
    %318 = vmatpush1.msra.mxu0 0.0
    %319 = vmatprep.subr.mxu0 0.0
    %320 = vmatpush1.msra.mxu0 0.0
    %321 = vmatprep.subr.mxu0 0.0
    %322 = vmatpush1.msra.mxu0 0.0
    %323 = vmatprep.subr.mxu0 0.0
    %324 = vmatpush1.msra.mxu0 0.0
    %325 = vmatprep.subr.mxu0 0.0
    %326 = vmatpush1.msra.mxu0 0.0
    %327 = vmatprep.subr.mxu0 0.0
    %328 = vmatpush1.msra.mxu0 0.0
    %329 = vmatprep.subr.mxu0 0.0
    %330 = vmatpush1.msra.mxu0 0.0
    %331 = vmatprep.subr.mxu0 0.0
    %332 = vmatpush1.msra.mxu0 0.0
    %333 = vmatprep.subr.mxu0 0.0
    %334 = vmatpush1.msra.mxu0 0.0
    %335 = vmatprep.subr.mxu0 0.0
    %336 = vmatpush1.msra.mxu0 0.0
    %337 = vmatprep.subr.mxu0 0.0
    %338 = vmatpush1.msra.mxu0 0.0
    %339 = vmatprep.subr.mxu0 0.0
    %340 = vmatpush1.msra.mxu0 0.0
    %341 = vmatprep.subr.mxu0 0.0
    %342 = vmatpush1.msra.mxu0 0.0
    %343 = vmatprep.subr.mxu0 0.0
    %344 = vmatpush1.msra.mxu0 0.0
    %345 = vmatprep.subr.mxu0 0.0
    %346 = vmatpush1.msra.mxu0 0.0
    %347 = vmatprep.subr.mxu0 0.0
    %348 = vmatpush1.msra.mxu0 0.0
    %349 = vmatprep.subr.mxu0 0.0
    %350 = vmatpush1.msra.mxu0 0.0
    %351 = vmatprep.subr.mxu0 0.0
    %352 = vmatpush1.msra.mxu0 0.0
    %353 = vmatprep.subr.mxu0 0.0
    %354 = vmatpush1.msra.mxu0 0.0
    %355 = vmatprep.subr.mxu0 0.0
    %356 = vmatpush1.msra.mxu0 0.0
    %357 = vmatprep.subr.mxu0 0.0
    %358 = vmatpush1.msra.mxu0 0.0
    %359 = vmatprep.subr.mxu0 0.0
    %360 = vmatpush1.msra.mxu0 0.0
    %361 = vmatprep.subr.mxu0 0.0
    %362 = vmatpush1.msra.mxu0 0.0
    %363 = vmatprep.subr.mxu0 0.0
    %364 = vmatpush1.msra.mxu0 0.0
    %365 = vmatprep.mubr.f32.mxu0 0.0
    %366 = vmatmul.mubr.f32.gmra.mrb[0].mxu0 %v228
    %v367 = vpop.f32.mrb[0].mxu0
    %v368 = vadd.f32 0.0, %v367
    %v369 = vpop.f32.mrb[0].mxu0
    %370 = vdwg.mxu0
    %s371 = scalar_lea.vmem [#allocation3], 24
    %372 = vst [vmem:[%s371] sm:$0x3f] %v297
    %373 = vst [vmem:[%s371 + $0x8] sm:$0x3f] %v299
    %374 = vst [vmem:[%s371 + $0x10] sm:$0x3f] %v368
    %v375 = vld [vmem:[#allocation5] sm:$0xff]
    %v376 = vld [vmem:[#allocation5 + $0x8] sm:$0xff]
    %v377 = vld [vmem:[#allocation5 + $0x10] sm:$0xff]
    %v378 = vld [vmem:[#allocation5 + $0x18] sm:$0xff]
    %v379 = vld [vmem:[#allocation5 + $0x20] sm:$0xff]
    %v380 = vld [vmem:[#allocation5 + $0x28] sm:$0xff]
    %v381 = vld [vmem:[#allocation5 + $0x30] sm:$0xff]
    %v382 = vld [vmem:[#allocation5 + $0x38] sm:$0xff]
    %v383 = vld [vmem:[#allocation5 + $0x40] sm:$0xff]
    %v384 = vld [vmem:[#allocation5 + $0x48] sm:$0xff]
    %v385 = vld [vmem:[#allocation5 + $0x50] sm:$0xff]
    %v386 = vld [vmem:[#allocation5 + $0x58] sm:$0xff]
    %v387 = vld [vmem:[#allocation5 + $0x60] sm:$0xff]
    %v388 = vld [vmem:[#allocation5 + $0x68] sm:$0xff]
    %v389 = vld [vmem:[#allocation5 + $0x70] sm:$0xff]
    %v390 = vld [vmem:[#allocation5 + $0x78] sm:$0xff]
    %v391 = vld [vmem:[#allocation5 + $0x80] sm:$0xff]
    %v392 = vld [vmem:[#allocation5 + $0x88] sm:$0xff]
    %v393 = vld [vmem:[#allocation5 + $0x90] sm:$0xff]
    %v394 = vld [vmem:[#allocation5 + $0x98] sm:$0xff]
    %v395 = vld [vmem:[#allocation5 + $0xa0] sm:$0xff]
    %v396 = vld [vmem:[#allocation5 + $0xa8] sm:$0xff]
    %v397 = vld [vmem:[#allocation5 + $0xb0] sm:$0xff]
    %v398 = vld [vmem:[#allocation5 + $0xb8] sm:$0xff]
    %v399 = vld [vmem:[#allocation5 + $0xc0] sm:$0xff]
    %v400 = vld [vmem:[#allocation5 + $0xc8] sm:$0xff]
    %v401 = vld [vmem:[#allocation5 + $0xd0] sm:$0xff]
    %v402 = vld [vmem:[#allocation5 + $0xd8] sm:$0xff]
    %v403 = vld [vmem:[#allocation5 + $0xe0] sm:$0xff]
    %v404 = vld [vmem:[#allocation5 + $0xe8] sm:$0xff]
    %v405 = vld [vmem:[#allocation5 + $0xf0] sm:$0xff]
    %v406 = vld [vmem:[#allocation5 + $0xf8] sm:$0xff]
    %v407 = vld [vmem:[#allocation5 + $0x100] sm:$0xff]
    %v408 = vld [vmem:[#allocation5 + $0x108] sm:$0xff]
    %v409 = vld [vmem:[#allocation5 + $0x110] sm:$0xff]
    %v410 = vld [vmem:[#allocation5 + $0x118] sm:$0xff]
    %v411 = vld [vmem:[#allocation5 + $0x120] sm:$0xff]
    %v412 = vld [vmem:[#allocation5 + $0x128] sm:$0xff]
    %v413 = vld [vmem:[#allocation5 + $0x130] sm:$0xff]
    %v414 = vld [vmem:[#allocation5 + $0x138] sm:$0xff]
    %v415 = vld [vmem:[#allocation5 + $0x140] sm:$0xff]
    %v416 = vld [vmem:[#allocation5 + $0x148] sm:$0xff]
    %v417 = vld [vmem:[#allocation5 + $0x150] sm:$0xff]
    %v418 = vld [vmem:[#allocation5 + $0x158] sm:$0xff]
    %v419 = vld [vmem:[#allocation5 + $0x160] sm:$0xff]
    %v420 = vld [vmem:[#allocation5 + $0x168] sm:$0xff]
    %v421 = vld [vmem:[#allocation5 + $0x170] sm:$0xff]
    %v422 = vld [vmem:[#allocation5 + $0x178] sm:$0xff]
    %v423 = vld [vmem:[#allocation2] sm:$0x3]
    %v424 = vld [vmem:[#allocation3] ss:$8 sm:$0x7]
    %v425 = vld [vmem:[%s371] ss:$8 sm:$0x7]
    %v427 = vlaneseq
    %v428 = vshrl.u32 %v427, 7
    %v429 = vsub.s32 0, %v428
    %v430 = vrot.slane %v424, %v429
    %v431 = vlaneseq
    %v432 = vshrl.u32 %v431, 7
    %v433 = vsub.s32 1, %v432
    %v434 = vrot.slane %v424, %v433
    %v435 = vlaneseq
    %v436 = vshrl.u32 %v435, 7
    %v437 = vsub.s32 2, %v436
    %v438 = vrot.slane %v424, %v437
    %v443 = vlaneseq
    %v444 = vshrl.u32 %v443, 7
    %v445 = vsub.s32 0, %v444
    %v446 = vrot.slane %v425, %v445
    %v447 = vlaneseq
    %v448 = vshrl.u32 %v447, 7
    %v449 = vsub.s32 1, %v448
    %v450 = vrot.slane %v425, %v449
    %v451 = vlaneseq
    %v452 = vshrl.u32 %v451, 7
    %v453 = vsub.s32 2, %v452
    %v454 = vrot.slane %v425, %v453
    %vm458 = vcmask 1040384
    %v459 = vsel %vm458, %v430, %v446
    %v460 = vsel %vm458, %v434, %v450
    %v461 = vsel %vm458, %v438, %v454
    %462 = vmatprep.subr.mxu0 %v376
    %463 = vmatpush1.msra.mxu0 %v375
    %464 = vmatprep.subr.mxu0 %v379
    %465 = vmatpush1.msra.mxu0 %v378
    %466 = vmatprep.subr.mxu0 %v382
    %467 = vmatpush1.msra.mxu0 %v381
    %468 = vmatprep.subr.mxu0 %v385
    %469 = vmatpush1.msra.mxu0 %v384
    %470 = vmatprep.subr.mxu0 %v388
    %471 = vmatpush1.msra.mxu0 %v387
    %472 = vmatprep.subr.mxu0 %v391
    %473 = vmatpush1.msra.mxu0 %v390
    %474 = vmatprep.subr.mxu0 %v394
    %475 = vmatpush1.msra.mxu0 %v393
    %476 = vmatprep.subr.mxu0 %v397
    %477 = vmatpush1.msra.mxu0 %v396
    %478 = vmatprep.subr.mxu0 %v400
    %479 = vmatpush1.msra.mxu0 %v399
    %480 = vmatprep.subr.mxu0 %v403
    %481 = vmatpush1.msra.mxu0 %v402
    %482 = vmatprep.subr.mxu0 %v406
    %483 = vmatpush1.msra.mxu0 %v405
    %484 = vmatprep.subr.mxu0 %v409
    %485 = vmatpush1.msra.mxu0 %v408
    %486 = vmatprep.subr.mxu0 %v412
    %487 = vmatpush1.msra.mxu0 %v411
    %488 = vmatprep.subr.mxu0 %v415
    %489 = vmatpush1.msra.mxu0 %v414
    %490 = vmatprep.subr.mxu0 %v418
    %491 = vmatpush1.msra.mxu0 %v417
    %492 = vmatprep.subr.mxu0 %v421
    %493 = vmatpush1.msra.mxu0 %v420
    %494 = vmatprep.subr.mxu0 0.0
    %495 = vmatpush1.msra.mxu0 0.0
    %496 = vmatprep.subr.mxu0 0.0
    %497 = vmatpush1.msra.mxu0 0.0
    %498 = vmatprep.subr.mxu0 0.0
    %499 = vmatpush1.msra.mxu0 0.0
    %500 = vmatprep.subr.mxu0 0.0
    %501 = vmatpush1.msra.mxu0 0.0
    %502 = vmatprep.subr.mxu0 0.0
    %503 = vmatpush1.msra.mxu0 0.0
    %504 = vmatprep.subr.mxu0 0.0
    %505 = vmatpush1.msra.mxu0 0.0
    %506 = vmatprep.subr.mxu0 0.0
    %507 = vmatpush1.msra.mxu0 0.0
    %508 = vmatprep.subr.mxu0 0.0
    %509 = vmatpush1.msra.mxu0 0.0
    %510 = vmatprep.subr.mxu0 0.0
    %511 = vmatpush1.msra.mxu0 0.0
    %512 = vmatprep.subr.mxu0 0.0
    %513 = vmatpush1.msra.mxu0 0.0
    %514 = vmatprep.subr.mxu0 0.0
    %515 = vmatpush1.msra.mxu0 0.0
    %516 = vmatprep.subr.mxu0 0.0
    %517 = vmatpush1.msra.mxu0 0.0
    %518 = vmatprep.subr.mxu0 0.0
    %519 = vmatpush1.msra.mxu0 0.0
    %520 = vmatprep.subr.mxu0 0.0
    %521 = vmatpush1.msra.mxu0 0.0
    %522 = vmatprep.subr.mxu0 0.0
    %523 = vmatpush1.msra.mxu0 0.0
    %524 = vmatprep.subr.mxu0 0.0
    %525 = vmatpush1.msra.mxu0 0.0
    %526 = vmatprep.mubr.f32.mxu0 0.0
    %527 = vmatmul.mubr.f32.gmra.mrb[0].mxu0 %v423
    %v528 = vpop.f32.mrb[0].mxu0
    %v529 = vadd.f32 0.0, %v528
    %v530 = vpop.f32.mrb[0].mxu0
    %v531 = vadd.f32 0.0, %v530
    %532 = vdwg.mxu0
    %533 = vmatprep.subr.mxu0 0.0
    %534 = vmatpush1.msra.mxu0 %v377
    %535 = vmatprep.subr.mxu0 0.0
    %536 = vmatpush1.msra.mxu0 %v380
    %537 = vmatprep.subr.mxu0 0.0
    %538 = vmatpush1.msra.mxu0 %v383
    %539 = vmatprep.subr.mxu0 0.0
    %540 = vmatpush1.msra.mxu0 %v386
    %541 = vmatprep.subr.mxu0 0.0
    %542 = vmatpush1.msra.mxu0 %v389
    %543 = vmatprep.subr.mxu0 0.0
    %544 = vmatpush1.msra.mxu0 %v392
    %545 = vmatprep.subr.mxu0 0.0
    %546 = vmatpush1.msra.mxu0 %v395
    %547 = vmatprep.subr.mxu0 0.0
    %548 = vmatpush1.msra.mxu0 %v398
    %549 = vmatprep.subr.mxu0 0.0
    %550 = vmatpush1.msra.mxu0 %v401
    %551 = vmatprep.subr.mxu0 0.0
    %552 = vmatpush1.msra.mxu0 %v404
    %553 = vmatprep.subr.mxu0 0.0
    %554 = vmatpush1.msra.mxu0 %v407
    %555 = vmatprep.subr.mxu0 0.0
    %556 = vmatpush1.msra.mxu0 %v410
    %557 = vmatprep.subr.mxu0 0.0
    %558 = vmatpush1.msra.mxu0 %v413
    %559 = vmatprep.subr.mxu0 0.0
    %560 = vmatpush1.msra.mxu0 %v416
    %561 = vmatprep.subr.mxu0 0.0
    %562 = vmatpush1.msra.mxu0 %v419
    %563 = vmatprep.subr.mxu0 0.0
    %564 = vmatpush1.msra.mxu0 %v422
    %565 = vmatprep.subr.mxu0 0.0
    %566 = vmatpush1.msra.mxu0 0.0
    %567 = vmatprep.subr.mxu0 0.0
    %568 = vmatpush1.msra.mxu0 0.0
    %569 = vmatprep.subr.mxu0 0.0
    %570 = vmatpush1.msra.mxu0 0.0
    %571 = vmatprep.subr.mxu0 0.0
    %572 = vmatpush1.msra.mxu0 0.0
    %573 = vmatprep.subr.mxu0 0.0
    %574 = vmatpush1.msra.mxu0 0.0
    %575 = vmatprep.subr.mxu0 0.0
    %576 = vmatpush1.msra.mxu0 0.0
    %577 = vmatprep.subr.mxu0 0.0
    %578 = vmatpush1.msra.mxu0 0.0
    %579 = vmatprep.subr.mxu0 0.0
    %580 = vmatpush1.msra.mxu0 0.0
    %581 = vmatprep.subr.mxu0 0.0
    %582 = vmatpush1.msra.mxu0 0.0
    %583 = vmatprep.subr.mxu0 0.0
    %584 = vmatpush1.msra.mxu0 0.0
    %585 = vmatprep.subr.mxu0 0.0
    %586 = vmatpush1.msra.mxu0 0.0
    %587 = vmatprep.subr.mxu0 0.0
    %588 = vmatpush1.msra.mxu0 0.0
    %589 = vmatprep.subr.mxu0 0.0
    %590 = vmatpush1.msra.mxu0 0.0
    %591 = vmatprep.subr.mxu0 0.0
    %592 = vmatpush1.msra.mxu0 0.0
    %593 = vmatprep.subr.mxu0 0.0
    %594 = vmatpush1.msra.mxu0 0.0
    %595 = vmatprep.subr.mxu0 0.0
    %596 = vmatpush1.msra.mxu0 0.0
    %597 = vmatprep.mubr.f32.mxu0 0.0
    %598 = vmatmul.mubr.f32.gmra.mrb[0].mxu0 %v423
    %v599 = vpop.f32.mrb[0].mxu0
    %v600 = vadd.f32 0.0, %v599
    %v601 = vpop.f32.mrb[0].mxu0
    %602 = vdwg.mxu0
    %v603 = vadd.f32 %v459, %v529
    %v604 = vxor.u32 %v603, 2147483648
    %v605 = vmul.f32 %v604, 1.442695
    %v606 = vpow.pop %v605
    %v607 = vadd.f32 %v606, 1.0
    %v608 = vrcp.pop %v607
    %v609 = vmul.f32 1.0, %v608
    %v610 = vadd.f32 %v460, %v531
    %v611 = vxor.u32 %v610, 2147483648
    %v612 = vmul.f32 %v611, 1.442695
    %v613 = vpow.pop %v612
    %v614 = vadd.f32 %v613, 1.0
    %v615 = vrcp.pop %v614
    %v616 = vmul.f32 1.0, %v615
    %v617 = vmul.f32 %v609, %v600
    %v618 = vadd.f32 %v461, %v617
    %v619 = vtanh.pop %v618
    %v620 = vsub.f32 1.0, %v616
    %v621 = vmul.f32 %v620, %v619
    %v622 = vmul.f32 %v616, %v423
    %v623 = vadd.f32 %v621, %v622
    %624 = vst [vmem:[#allocation4] sm:$0x1] %v623
    %s625 = scalar_lea.vmem [#allocation4], 8
    %626 = vst [vmem:[%s625 - $0x1] sm:$0x2] %v623
    %s627 = scalar_lea.vmem [#allocation3], 1
    %v628 = vld [vmem:[%s627] ss:$8 sm:$0x7]
    %s629 = scalar_lea.vmem %s371, 1 [#allocation3]
    %v630 = vld [vmem:[%s629] ss:$8 sm:$0x7]
    %v632 = vlaneseq
    %v633 = vshrl.u32 %v632, 7
    %v634 = vsub.s32 0, %v633
    %v635 = vrot.slane %v628, %v634
    %v636 = vlaneseq
    %v637 = vshrl.u32 %v636, 7
    %v638 = vsub.s32 1, %v637
    %v639 = vrot.slane %v628, %v638
    %v640 = vlaneseq
    %v641 = vshrl.u32 %v640, 7
    %v642 = vsub.s32 2, %v641
    %v643 = vrot.slane %v628, %v642
    %v648 = vlaneseq
    %v649 = vshrl.u32 %v648, 7
    %v650 = vsub.s32 0, %v649
    %v651 = vrot.slane %v630, %v650
    %v652 = vlaneseq
    %v653 = vshrl.u32 %v652, 7
    %v654 = vsub.s32 1, %v653
    %v655 = vrot.slane %v630, %v654
    %v656 = vlaneseq
    %v657 = vshrl.u32 %v656, 7
    %v658 = vsub.s32 2, %v657
    %v659 = vrot.slane %v630, %v658
    %v663 = vsel %vm458, %v635, %v651
    %v664 = vsel %vm458, %v639, %v655
    %v665 = vsel %vm458, %v643, %v659
    %666 = vmatprep.subr.mxu0 %v376
    %667 = vmatpush1.msra.mxu0 %v375
    %668 = vmatprep.subr.mxu0 %v379
    %669 = vmatpush1.msra.mxu0 %v378
    %670 = vmatprep.subr.mxu0 %v382
    %671 = vmatpush1.msra.mxu0 %v381
    %672 = vmatprep.subr.mxu0 %v385
    %673 = vmatpush1.msra.mxu0 %v384
    %674 = vmatprep.subr.mxu0 %v388
    %675 = vmatpush1.msra.mxu0 %v387
    %676 = vmatprep.subr.mxu0 %v391
    %677 = vmatpush1.msra.mxu0 %v390
    %678 = vmatprep.subr.mxu0 %v394
    %679 = vmatpush1.msra.mxu0 %v393
    %680 = vmatprep.subr.mxu0 %v397
    %681 = vmatpush1.msra.mxu0 %v396
    %682 = vmatprep.subr.mxu0 %v400
    %683 = vmatpush1.msra.mxu0 %v399
    %684 = vmatprep.subr.mxu0 %v403
    %685 = vmatpush1.msra.mxu0 %v402
    %686 = vmatprep.subr.mxu0 %v406
    %687 = vmatpush1.msra.mxu0 %v405
    %688 = vmatprep.subr.mxu0 %v409
    %689 = vmatpush1.msra.mxu0 %v408
    %690 = vmatprep.subr.mxu0 %v412
    %691 = vmatpush1.msra.mxu0 %v411
    %692 = vmatprep.subr.mxu0 %v415
    %693 = vmatpush1.msra.mxu0 %v414
    %694 = vmatprep.subr.mxu0 %v418
    %695 = vmatpush1.msra.mxu0 %v417
    %696 = vmatprep.subr.mxu0 %v421
    %697 = vmatpush1.msra.mxu0 %v420
    %698 = vmatprep.subr.mxu0 0.0
    %699 = vmatpush1.msra.mxu0 0.0
    %700 = vmatprep.subr.mxu0 0.0
    %701 = vmatpush1.msra.mxu0 0.0
    %702 = vmatprep.subr.mxu0 0.0
    %703 = vmatpush1.msra.mxu0 0.0
    %704 = vmatprep.subr.mxu0 0.0
    %705 = vmatpush1.msra.mxu0 0.0
    %706 = vmatprep.subr.mxu0 0.0
    %707 = vmatpush1.msra.mxu0 0.0
    %708 = vmatprep.subr.mxu0 0.0
    %709 = vmatpush1.msra.mxu0 0.0
    %710 = vmatprep.subr.mxu0 0.0
    %711 = vmatpush1.msra.mxu0 0.0
    %712 = vmatprep.subr.mxu0 0.0
    %713 = vmatpush1.msra.mxu0 0.0
    %714 = vmatprep.subr.mxu0 0.0
    %715 = vmatpush1.msra.mxu0 0.0
    %716 = vmatprep.subr.mxu0 0.0
    %717 = vmatpush1.msra.mxu0 0.0
    %718 = vmatprep.subr.mxu0 0.0
    %719 = vmatpush1.msra.mxu0 0.0
    %720 = vmatprep.subr.mxu0 0.0
    %721 = vmatpush1.msra.mxu0 0.0
    %722 = vmatprep.subr.mxu0 0.0
    %723 = vmatpush1.msra.mxu0 0.0
    %724 = vmatprep.subr.mxu0 0.0
    %725 = vmatpush1.msra.mxu0 0.0
    %726 = vmatprep.subr.mxu0 0.0
    %727 = vmatpush1.msra.mxu0 0.0
    %728 = vmatprep.subr.mxu0 0.0
    %729 = vmatpush1.msra.mxu0 0.0
    %730 = vmatprep.mubr.f32.mxu0 0.0
    %731 = vmatmul.mubr.f32.gmra.mrb[0].mxu0 %v623
    %v732 = vpop.f32.mrb[0].mxu0
    %v733 = vadd.f32 0.0, %v732
    %v734 = vpop.f32.mrb[0].mxu0
    %v735 = vadd.f32 0.0, %v734
    %736 = vdwg.mxu0
    %737 = vmatprep.subr.mxu0 0.0
    %738 = vmatpush1.msra.mxu0 %v377
    %739 = vmatprep.subr.mxu0 0.0
    %740 = vmatpush1.msra.mxu0 %v380
    %741 = vmatprep.subr.mxu0 0.0
    %742 = vmatpush1.msra.mxu0 %v383
    %743 = vmatprep.subr.mxu0 0.0
    %744 = vmatpush1.msra.mxu0 %v386
    %745 = vmatprep.subr.mxu0 0.0
    %746 = vmatpush1.msra.mxu0 %v389
    %747 = vmatprep.subr.mxu0 0.0
    %748 = vmatpush1.msra.mxu0 %v392
    %749 = vmatprep.subr.mxu0 0.0
    %750 = vmatpush1.msra.mxu0 %v395
    %751 = vmatprep.subr.mxu0 0.0
    %752 = vmatpush1.msra.mxu0 %v398
    %753 = vmatprep.subr.mxu0 0.0
    %754 = vmatpush1.msra.mxu0 %v401
    %755 = vmatprep.subr.mxu0 0.0
    %756 = vmatpush1.msra.mxu0 %v404
    %757 = vmatprep.subr.mxu0 0.0
    %758 = vmatpush1.msra.mxu0 %v407
    %759 = vmatprep.subr.mxu0 0.0
    %760 = vmatpush1.msra.mxu0 %v410
    %761 = vmatprep.subr.mxu0 0.0
    %762 = vmatpush1.msra.mxu0 %v413
    %763 = vmatprep.subr.mxu0 0.0
    %764 = vmatpush1.msra.mxu0 %v416
    %765 = vmatprep.subr.mxu0 0.0
    %766 = vmatpush1.msra.mxu0 %v419
    %767 = vmatprep.subr.mxu0 0.0
    %768 = vmatpush1.msra.mxu0 %v422
    %769 = vmatprep.subr.mxu0 0.0
    %770 = vmatpush1.msra.mxu0 0.0
    %771 = vmatprep.subr.mxu0 0.0
    %772 = vmatpush1.msra.mxu0 0.0
    %773 = vmatprep.subr.mxu0 0.0
    %774 = vmatpush1.msra.mxu0 0.0
    %775 = vmatprep.subr.mxu0 0.0
    %776 = vmatpush1.msra.mxu0 0.0
    %777 = vmatprep.subr.mxu0 0.0
    %778 = vmatpush1.msra.mxu0 0.0
    %779 = vmatprep.subr.mxu0 0.0
    %780 = vmatpush1.msra.mxu0 0.0
    %781 = vmatprep.subr.mxu0 0.0
    %782 = vmatpush1.msra.mxu0 0.0
    %783 = vmatprep.subr.mxu0 0.0
    %784 = vmatpush1.msra.mxu0 0.0
    %785 = vmatprep.subr.mxu0 0.0
    %786 = vmatpush1.msra.mxu0 0.0
    %787 = vmatprep.subr.mxu0 0.0
    %788 = vmatpush1.msra.mxu0 0.0
    %789 = vmatprep.subr.mxu0 0.0
    %790 = vmatpush1.msra.mxu0 0.0
    %791 = vmatprep.subr.mxu0 0.0
    %792 = vmatpush1.msra.mxu0 0.0
    %793 = vmatprep.subr.mxu0 0.0
    %794 = vmatpush1.msra.mxu0 0.0
    %795 = vmatprep.subr.mxu0 0.0
    %796 = vmatpush1.msra.mxu0 0.0
    %797 = vmatprep.subr.mxu0 0.0
    %798 = vmatpush1.msra.mxu0 0.0
    %799 = vmatprep.subr.mxu0 0.0
    %800 = vmatpush1.msra.mxu0 0.0
    %801 = vmatprep.mubr.f32.mxu0 0.0
    %802 = vmatmul.mubr.f32.gmra.mrb[0].mxu0 %v623
    %v803 = vpop.f32.mrb[0].mxu0
    %v804 = vadd.f32 0.0, %v803
    %v805 = vpop.f32.mrb[0].mxu0
    %806 = vdwg.mxu0
    %v807 = vadd.f32 %v663, %v733
    %v808 = vxor.u32 %v807, 2147483648
    %v809 = vmul.f32 %v808, 1.442695
    %v810 = vpow.pop %v809
    %v811 = vadd.f32 %v810, 1.0
    %v812 = vrcp.pop %v811
    %v813 = vmul.f32 1.0, %v812
    %v814 = vadd.f32 %v664, %v735
    %v815 = vxor.u32 %v814, 2147483648
    %v816 = vmul.f32 %v815, 1.442695
    %v817 = vpow.pop %v816
    %v818 = vadd.f32 %v817, 1.0
    %v819 = vrcp.pop %v818
    %v820 = vmul.f32 1.0, %v819
    %v821 = vmul.f32 %v813, %v804
    %v822 = vadd.f32 %v665, %v821
    %v823 = vtanh.pop %v822
    %v824 = vsub.f32 1.0, %v820
    %v825 = vmul.f32 %v824, %v823
    %v826 = vmul.f32 %v820, %v623
    %v827 = vadd.f32 %v825, %v826
    %828 = vst [vmem:[#allocation4 + $0x1] sm:$0x1] %v827
    %829 = vst [vmem:[%s625] sm:$0x2] %v827
    %s830 = scalar_lea.vmem [#allocation3], 2
    %v831 = vld [vmem:[%s830] ss:$8 sm:$0x7]
    %s832 = scalar_lea.vmem %s371, 2 [#allocation3]
    %v833 = vld [vmem:[%s832] ss:$8 sm:$0x7]
    %v835 = vlaneseq
    %v836 = vshrl.u32 %v835, 7
    %v837 = vsub.s32 0, %v836
    %v838 = vrot.slane %v831, %v837
    %v839 = vlaneseq
    %v840 = vshrl.u32 %v839, 7
    %v841 = vsub.s32 1, %v840
    %v842 = vrot.slane %v831, %v841
    %v843 = vlaneseq
    %v844 = vshrl.u32 %v843, 7
    %v845 = vsub.s32 2, %v844
    %v846 = vrot.slane %v831, %v845
    %v851 = vlaneseq
    %v852 = vshrl.u32 %v851, 7
    %v853 = vsub.s32 0, %v852
    %v854 = vrot.slane %v833, %v853
    %v855 = vlaneseq
    %v856 = vshrl.u32 %v855, 7
    %v857 = vsub.s32 1, %v856
    %v858 = vrot.slane %v833, %v857
    %v859 = vlaneseq
    %v860 = vshrl.u32 %v859, 7
    %v861 = vsub.s32 2, %v860
    %v862 = vrot.slane %v833, %v861
    %v866 = vsel %vm458, %v838, %v854
    %v867 = vsel %vm458, %v842, %v858
    %v868 = vsel %vm458, %v846, %v862
    %869 = vmatprep.subr.mxu0 %v376
    %870 = vmatpush1.msra.mxu0 %v375
    %871 = vmatprep.subr.mxu0 %v379
    %872 = vmatpush1.msra.mxu0 %v378
    %873 = vmatprep.subr.mxu0 %v382
    %874 = vmatpush1.msra.mxu0 %v381
    %875 = vmatprep.subr.mxu0 %v385
    %876 = vmatpush1.msra.mxu0 %v384
    %877 = vmatprep.subr.mxu0 %v388
    %878 = vmatpush1.msra.mxu0 %v387
    %879 = vmatprep.subr.mxu0 %v391
    %880 = vmatpush1.msra.mxu0 %v390
    %881 = vmatprep.subr.mxu0 %v394
    %882 = vmatpush1.msra.mxu0 %v393
    %883 = vmatprep.subr.mxu0 %v397
    %884 = vmatpush1.msra.mxu0 %v396
    %885 = vmatprep.subr.mxu0 %v400
    %886 = vmatpush1.msra.mxu0 %v399
    %887 = vmatprep.subr.mxu0 %v403
    %888 = vmatpush1.msra.mxu0 %v402
    %889 = vmatprep.subr.mxu0 %v406
    %890 = vmatpush1.msra.mxu0 %v405
    %891 = vmatprep.subr.mxu0 %v409
    %892 = vmatpush1.msra.mxu0 %v408
    %893 = vmatprep.subr.mxu0 %v412
    %894 = vmatpush1.msra.mxu0 %v411
    %895 = vmatprep.subr.mxu0 %v415
    %896 = vmatpush1.msra.mxu0 %v414
    %897 = vmatprep.subr.mxu0 %v418
    %898 = vmatpush1.msra.mxu0 %v417
    %899 = vmatprep.subr.mxu0 %v421
    %900 = vmatpush1.msra.mxu0 %v420
    %901 = vmatprep.subr.mxu0 0.0
    %902 = vmatpush1.msra.mxu0 0.0
    %903 = vmatprep.subr.mxu0 0.0
    %904 = vmatpush1.msra.mxu0 0.0
    %905 = vmatprep.subr.mxu0 0.0
    %906 = vmatpush1.msra.mxu0 0.0
    %907 = vmatprep.subr.mxu0 0.0
    %908 = vmatpush1.msra.mxu0 0.0
    %909 = vmatprep.subr.mxu0 0.0
    %910 = vmatpush1.msra.mxu0 0.0
    %911 = vmatprep.subr.mxu0 0.0
    %912 = vmatpush1.msra.mxu0 0.0
    %913 = vmatprep.subr.mxu0 0.0
    %914 = vmatpush1.msra.mxu0 0.0
    %915 = vmatprep.subr.mxu0 0.0
    %916 = vmatpush1.msra.mxu0 0.0
    %917 = vmatprep.subr.mxu0 0.0
    %918 = vmatpush1.msra.mxu0 0.0
    %919 = vmatprep.subr.mxu0 0.0
    %920 = vmatpush1.msra.mxu0 0.0
    %921 = vmatprep.subr.mxu0 0.0
    %922 = vmatpush1.msra.mxu0 0.0
    %923 = vmatprep.subr.mxu0 0.0
    %924 = vmatpush1.msra.mxu0 0.0
    %925 = vmatprep.subr.mxu0 0.0
    %926 = vmatpush1.msra.mxu0 0.0
    %927 = vmatprep.subr.mxu0 0.0
    %928 = vmatpush1.msra.mxu0 0.0
    %929 = vmatprep.subr.mxu0 0.0
    %930 = vmatpush1.msra.mxu0 0.0
    %931 = vmatprep.subr.mxu0 0.0
    %932 = vmatpush1.msra.mxu0 0.0
    %933 = vmatprep.mubr.f32.mxu0 0.0
    %934 = vmatmul.mubr.f32.gmra.mrb[0].mxu0 %v827
    %v935 = vpop.f32.mrb[0].mxu0
    %v936 = vadd.f32 0.0, %v935
    %v937 = vpop.f32.mrb[0].mxu0
    %v938 = vadd.f32 0.0, %v937
    %939 = vdwg.mxu0
    %940 = vmatprep.subr.mxu0 0.0
    %941 = vmatpush1.msra.mxu0 %v377
    %942 = vmatprep.subr.mxu0 0.0
    %943 = vmatpush1.msra.mxu0 %v380
    %944 = vmatprep.subr.mxu0 0.0
    %945 = vmatpush1.msra.mxu0 %v383
    %946 = vmatprep.subr.mxu0 0.0
    %947 = vmatpush1.msra.mxu0 %v386
    %948 = vmatprep.subr.mxu0 0.0
    %949 = vmatpush1.msra.mxu0 %v389
    %950 = vmatprep.subr.mxu0 0.0
    %951 = vmatpush1.msra.mxu0 %v392
    %952 = vmatprep.subr.mxu0 0.0
    %953 = vmatpush1.msra.mxu0 %v395
    %954 = vmatprep.subr.mxu0 0.0
    %955 = vmatpush1.msra.mxu0 %v398
    %956 = vmatprep.subr.mxu0 0.0
    %957 = vmatpush1.msra.mxu0 %v401
    %958 = vmatprep.subr.mxu0 0.0
    %959 = vmatpush1.msra.mxu0 %v404
    %960 = vmatprep.subr.mxu0 0.0
    %961 = vmatpush1.msra.mxu0 %v407
    %962 = vmatprep.subr.mxu0 0.0
    %963 = vmatpush1.msra.mxu0 %v410
    %964 = vmatprep.subr.mxu0 0.0
    %965 = vmatpush1.msra.mxu0 %v413
    %966 = vmatprep.subr.mxu0 0.0
    %967 = vmatpush1.msra.mxu0 %v416
    %968 = vmatprep.subr.mxu0 0.0
    %969 = vmatpush1.msra.mxu0 %v419
    %970 = vmatprep.subr.mxu0 0.0
    %971 = vmatpush1.msra.mxu0 %v422
    %972 = vmatprep.subr.mxu0 0.0
    %973 = vmatpush1.msra.mxu0 0.0
    %974 = vmatprep.subr.mxu0 0.0
    %975 = vmatpush1.msra.mxu0 0.0
    %976 = vmatprep.subr.mxu0 0.0
    %977 = vmatpush1.msra.mxu0 0.0
    %978 = vmatprep.subr.mxu0 0.0
    %979 = vmatpush1.msra.mxu0 0.0
    %980 = vmatprep.subr.mxu0 0.0
    %981 = vmatpush1.msra.mxu0 0.0
    %982 = vmatprep.subr.mxu0 0.0
    %983 = vmatpush1.msra.mxu0 0.0
    %984 = vmatprep.subr.mxu0 0.0
    %985 = vmatpush1.msra.mxu0 0.0
    %986 = vmatprep.subr.mxu0 0.0
    %987 = vmatpush1.msra.mxu0 0.0
    %988 = vmatprep.subr.mxu0 0.0
    %989 = vmatpush1.msra.mxu0 0.0
    %990 = vmatprep.subr.mxu0 0.0
    %991 = vmatpush1.msra.mxu0 0.0
    %992 = vmatprep.subr.mxu0 0.0
    %993 = vmatpush1.msra.mxu0 0.0
    %994 = vmatprep.subr.mxu0 0.0
    %995 = vmatpush1.msra.mxu0 0.0
    %996 = vmatprep.subr.mxu0 0.0
    %997 = vmatpush1.msra.mxu0 0.0
    %998 = vmatprep.subr.mxu0 0.0
    %999 = vmatpush1.msra.mxu0 0.0
    %1000 = vmatprep.subr.mxu0 0.0
    %1001 = vmatpush1.msra.mxu0 0.0
    %1002 = vmatprep.subr.mxu0 0.0
    %1003 = vmatpush1.msra.mxu0 0.0
    %1004 = vmatprep.mubr.f32.mxu0 0.0
    %1005 = vmatmul.mubr.f32.gmra.mrb[0].mxu0 %v827
    %v1006 = vpop.f32.mrb[0].mxu0
    %v1007 = vadd.f32 0.0, %v1006
    %v1008 = vpop.f32.mrb[0].mxu0
    %1009 = vdwg.mxu0
    %v1010 = vadd.f32 %v866, %v936
    %v1011 = vxor.u32 %v1010, 2147483648
    %v1012 = vmul.f32 %v1011, 1.442695
    %v1013 = vpow.pop %v1012
    %v1014 = vadd.f32 %v1013, 1.0
    %v1015 = vrcp.pop %v1014
    %v1016 = vmul.f32 1.0, %v1015
    %v1017 = vadd.f32 %v867, %v938
    %v1018 = vxor.u32 %v1017, 2147483648
    %v1019 = vmul.f32 %v1018, 1.442695
    %v1020 = vpow.pop %v1019
    %v1021 = vadd.f32 %v1020, 1.0
    %v1022 = vrcp.pop %v1021
    %v1023 = vmul.f32 1.0, %v1022
    %v1024 = vmul.f32 %v1016, %v1007
    %v1025 = vadd.f32 %v868, %v1024
    %v1026 = vtanh.pop %v1025
    %v1027 = vsub.f32 1.0, %v1023
    %v1028 = vmul.f32 %v1027, %v1026
    %v1029 = vmul.f32 %v1023, %v827
    %v1030 = vadd.f32 %v1028, %v1029
    %1031 = vst [vmem:[#allocation4 + $0x2] sm:$0x1] %v1030
    %1032 = vst [vmem:[%s625 + $0x1] sm:$0x2] %v1030
    %s1033 = scalar_lea.vmem [#allocation3], 3
    %v1034 = vld [vmem:[%s1033] ss:$8 sm:$0x7]
    %s1035 = scalar_lea.vmem %s371, 3 [#allocation3]
    %v1036 = vld [vmem:[%s1035] ss:$8 sm:$0x7]
    %v1038 = vlaneseq
    %v1039 = vshrl.u32 %v1038, 7
    %v1040 = vsub.s32 0, %v1039
    %v1041 = vrot.slane %v1034, %v1040
    %v1042 = vlaneseq
    %v1043 = vshrl.u32 %v1042, 7
    %v1044 = vsub.s32 1, %v1043
    %v1045 = vrot.slane %v1034, %v1044
    %v1046 = vlaneseq
    %v1047 = vshrl.u32 %v1046, 7
    %v1048 = vsub.s32 2, %v1047
    %v1049 = vrot.slane %v1034, %v1048
    %v1054 = vlaneseq
    %v1055 = vshrl.u32 %v1054, 7
    %v1056 = vsub.s32 0, %v1055
    %v1057 = vrot.slane %v1036, %v1056
    %v1058 = vlaneseq
    %v1059 = vshrl.u32 %v1058, 7
    %v1060 = vsub.s32 1, %v1059
    %v1061 = vrot.slane %v1036, %v1060
    %v1062 = vlaneseq
    %v1063 = vshrl.u32 %v1062, 7
    %v1064 = vsub.s32 2, %v1063
    %v1065 = vrot.slane %v1036, %v1064
    %v1069 = vsel %vm458, %v1041, %v1057
    %v1070 = vsel %vm458, %v1045, %v1061
    %v1071 = vsel %vm458, %v1049, %v1065
    %1072 = vmatprep.subr.mxu0 %v376
    %1073 = vmatpush1.msra.mxu0 %v375
    %1074 = vmatprep.subr.mxu0 %v379
    %1075 = vmatpush1.msra.mxu0 %v378
    %1076 = vmatprep.subr.mxu0 %v382
    %1077 = vmatpush1.msra.mxu0 %v381
    %1078 = vmatprep.subr.mxu0 %v385
    %1079 = vmatpush1.msra.mxu0 %v384
    %1080 = vmatprep.subr.mxu0 %v388
    %1081 = vmatpush1.msra.mxu0 %v387
    %1082 = vmatprep.subr.mxu0 %v391
    %1083 = vmatpush1.msra.mxu0 %v390
    %1084 = vmatprep.subr.mxu0 %v394
    %1085 = vmatpush1.msra.mxu0 %v393
    %1086 = vmatprep.subr.mxu0 %v397
    %1087 = vmatpush1.msra.mxu0 %v396
    %1088 = vmatprep.subr.mxu0 %v400
    %1089 = vmatpush1.msra.mxu0 %v399
    %1090 = vmatprep.subr.mxu0 %v403
    %1091 = vmatpush1.msra.mxu0 %v402
    %1092 = vmatprep.subr.mxu0 %v406
    %1093 = vmatpush1.msra.mxu0 %v405
    %1094 = vmatprep.subr.mxu0 %v409
    %1095 = vmatpush1.msra.mxu0 %v408
    %1096 = vmatprep.subr.mxu0 %v412
    %1097 = vmatpush1.msra.mxu0 %v411
    %1098 = vmatprep.subr.mxu0 %v415
    %1099 = vmatpush1.msra.mxu0 %v414
    %1100 = vmatprep.subr.mxu0 %v418
    %1101 = vmatpush1.msra.mxu0 %v417
    %1102 = vmatprep.subr.mxu0 %v421
    %1103 = vmatpush1.msra.mxu0 %v420
    %1104 = vmatprep.subr.mxu0 0.0
    %1105 = vmatpush1.msra.mxu0 0.0
    %1106 = vmatprep.subr.mxu0 0.0
    %1107 = vmatpush1.msra.mxu0 0.0
    %1108 = vmatprep.subr.mxu0 0.0
    %1109 = vmatpush1.msra.mxu0 0.0
    %1110 = vmatprep.subr.mxu0 0.0
    %1111 = vmatpush1.msra.mxu0 0.0
    %1112 = vmatprep.subr.mxu0 0.0
    %1113 = vmatpush1.msra.mxu0 0.0
    %1114 = vmatprep.subr.mxu0 0.0
    %1115 = vmatpush1.msra.mxu0 0.0
    %1116 = vmatprep.subr.mxu0 0.0
    %1117 = vmatpush1.msra.mxu0 0.0
    %1118 = vmatprep.subr.mxu0 0.0
    %1119 = vmatpush1.msra.mxu0 0.0
    %1120 = vmatprep.subr.mxu0 0.0
    %1121 = vmatpush1.msra.mxu0 0.0
    %1122 = vmatprep.subr.mxu0 0.0
    %1123 = vmatpush1.msra.mxu0 0.0
    %1124 = vmatprep.subr.mxu0 0.0
    %1125 = vmatpush1.msra.mxu0 0.0
    %1126 = vmatprep.subr.mxu0 0.0
    %1127 = vmatpush1.msra.mxu0 0.0
    %1128 = vmatprep.subr.mxu0 0.0
    %1129 = vmatpush1.msra.mxu0 0.0
    %1130 = vmatprep.subr.mxu0 0.0
    %1131 = vmatpush1.msra.mxu0 0.0
    %1132 = vmatprep.subr.mxu0 0.0
    %1133 = vmatpush1.msra.mxu0 0.0
    %1134 = vmatprep.subr.mxu0 0.0
    %1135 = vmatpush1.msra.mxu0 0.0
    %1136 = vmatprep.mubr.f32.mxu0 0.0
    %1137 = vmatmul.mubr.f32.gmra.mrb[0].mxu0 %v1030
    %v1138 = vpop.f32.mrb[0].mxu0
    %v1139 = vadd.f32 0.0, %v1138
    %v1140 = vpop.f32.mrb[0].mxu0
    %v1141 = vadd.f32 0.0, %v1140
    %1142 = vdwg.mxu0
    %1143 = vmatprep.subr.mxu0 0.0
    %1144 = vmatpush1.msra.mxu0 %v377
    %1145 = vmatprep.subr.mxu0 0.0
    %1146 = vmatpush1.msra.mxu0 %v380
    %1147 = vmatprep.subr.mxu0 0.0
    %1148 = vmatpush1.msra.mxu0 %v383
    %1149 = vmatprep.subr.mxu0 0.0
    %1150 = vmatpush1.msra.mxu0 %v386
    %1151 = vmatprep.subr.mxu0 0.0
    %1152 = vmatpush1.msra.mxu0 %v389
    %1153 = vmatprep.subr.mxu0 0.0
    %1154 = vmatpush1.msra.mxu0 %v392
    %1155 = vmatprep.subr.mxu0 0.0
    %1156 = vmatpush1.msra.mxu0 %v395
    %1157 = vmatprep.subr.mxu0 0.0
    %1158 = vmatpush1.msra.mxu0 %v398
    %1159 = vmatprep.subr.mxu0 0.0
    %1160 = vmatpush1.msra.mxu0 %v401
    %1161 = vmatprep.subr.mxu0 0.0
    %1162 = vmatpush1.msra.mxu0 %v404
    %1163 = vmatprep.subr.mxu0 0.0
    %1164 = vmatpush1.msra.mxu0 %v407
    %1165 = vmatprep.subr.mxu0 0.0
    %1166 = vmatpush1.msra.mxu0 %v410
    %1167 = vmatprep.subr.mxu0 0.0
    %1168 = vmatpush1.msra.mxu0 %v413
    %1169 = vmatprep.subr.mxu0 0.0
    %1170 = vmatpush1.msra.mxu0 %v416
    %1171 = vmatprep.subr.mxu0 0.0
    %1172 = vmatpush1.msra.mxu0 %v419
    %1173 = vmatprep.subr.mxu0 0.0
    %1174 = vmatpush1.msra.mxu0 %v422
    %1175 = vmatprep.subr.mxu0 0.0
    %1176 = vmatpush1.msra.mxu0 0.0
    %1177 = vmatprep.subr.mxu0 0.0
    %1178 = vmatpush1.msra.mxu0 0.0
    %1179 = vmatprep.subr.mxu0 0.0
    %1180 = vmatpush1.msra.mxu0 0.0
    %1181 = vmatprep.subr.mxu0 0.0
    %1182 = vmatpush1.msra.mxu0 0.0
    %1183 = vmatprep.subr.mxu0 0.0
    %1184 = vmatpush1.msra.mxu0 0.0
    %1185 = vmatprep.subr.mxu0 0.0
    %1186 = vmatpush1.msra.mxu0 0.0
    %1187 = vmatprep.subr.mxu0 0.0
    %1188 = vmatpush1.msra.mxu0 0.0
    %1189 = vmatprep.subr.mxu0 0.0
    %1190 = vmatpush1.msra.mxu0 0.0
    %1191 = vmatprep.subr.mxu0 0.0
    %1192 = vmatpush1.msra.mxu0 0.0
    %1193 = vmatprep.subr.mxu0 0.0
    %1194 = vmatpush1.msra.mxu0 0.0
    %1195 = vmatprep.subr.mxu0 0.0
    %1196 = vmatpush1.msra.mxu0 0.0
    %1197 = vmatprep.subr.mxu0 0.0
    %1198 = vmatpush1.msra.mxu0 0.0
    %1199 = vmatprep.subr.mxu0 0.0
    %1200 = vmatpush1.msra.mxu0 0.0
    %1201 = vmatprep.subr.mxu0 0.0
    %1202 = vmatpush1.msra.mxu0 0.0
    %1203 = vmatprep.subr.mxu0 0.0
    %1204 = vmatpush1.msra.mxu0 0.0
    %1205 = vmatprep.subr.mxu0 0.0
    %1206 = vmatpush1.msra.mxu0 0.0
    %1207 = vmatprep.mubr.f32.mxu0 0.0
    %1208 = vmatmul.mubr.f32.gmra.mrb[0].mxu0 %v1030
    %v1209 = vpop.f32.mrb[0].mxu0
    %v1210 = vadd.f32 0.0, %v1209
    %v1211 = vpop.f32.mrb[0].mxu0
    %1212 = vdwg.mxu0
    %v1213 = vadd.f32 %v1069, %v1139
    %v1214 = vxor.u32 %v1213, 2147483648
    %v1215 = vmul.f32 %v1214, 1.442695
    %v1216 = vpow.pop %v1215
    %v1217 = vadd.f32 %v1216, 1.0
    %v1218 = vrcp.pop %v1217
    %v1219 = vmul.f32 1.0, %v1218
    %v1220 = vadd.f32 %v1070, %v1141
    %v1221 = vxor.u32 %v1220, 2147483648
    %v1222 = vmul.f32 %v1221, 1.442695
    %v1223 = vpow.pop %v1222
    %v1224 = vadd.f32 %v1223, 1.0
    %v1225 = vrcp.pop %v1224
    %v1226 = vmul.f32 1.0, %v1225
    %v1227 = vmul.f32 %v1219, %v1210
    %v1228 = vadd.f32 %v1071, %v1227
    %v1229 = vtanh.pop %v1228
    %v1230 = vsub.f32 1.0, %v1226
    %v1231 = vmul.f32 %v1230, %v1229
    %v1232 = vmul.f32 %v1226, %v1030
    %v1233 = vadd.f32 %v1231, %v1232
    %1234 = vst [vmem:[#allocation4 + $0x3] sm:$0x1] %v1233
    %1235 = vst [vmem:[%s625 + $0x2] sm:$0x2] %v1233
    %s1236 = scalar_lea.vmem [#allocation3], 4
    %v1237 = vld [vmem:[%s1236] ss:$8 sm:$0x7]
    %s1238 = scalar_lea.vmem %s371, 4 [#allocation3]
    %v1239 = vld [vmem:[%s1238] ss:$8 sm:$0x7]
    %v1241 = vlaneseq
    %v1242 = vshrl.u32 %v1241, 7
    %v1243 = vsub.s32 0, %v1242
    %v1244 = vrot.slane %v1237, %v1243
    %v1245 = vlaneseq
    %v1246 = vshrl.u32 %v1245, 7
    %v1247 = vsub.s32 1, %v1246
    %v1248 = vrot.slane %v1237, %v1247
    %v1249 = vlaneseq
    %v1250 = vshrl.u32 %v1249, 7
    %v1251 = vsub.s32 2, %v1250
    %v1252 = vrot.slane %v1237, %v1251
    %v1257 = vlaneseq
    %v1258 = vshrl.u32 %v1257, 7
    %v1259 = vsub.s32 0, %v1258
    %v1260 = vrot.slane %v1239, %v1259
    %v1261 = vlaneseq
    %v1262 = vshrl.u32 %v1261, 7
    %v1263 = vsub.s32 1, %v1262
    %v1264 = vrot.slane %v1239, %v1263
    %v1265 = vlaneseq
    %v1266 = vshrl.u32 %v1265, 7
    %v1267 = vsub.s32 2, %v1266
    %v1268 = vrot.slane %v1239, %v1267
    %v1272 = vsel %vm458, %v1244, %v1260
    %v1273 = vsel %vm458, %v1248, %v1264
    %v1274 = vsel %vm458, %v1252, %v1268
    %1275 = vmatprep.subr.mxu0 %v376
    %1276 = vmatpush1.msra.mxu0 %v375
    %1277 = vmatprep.subr.mxu0 %v379
    %1278 = vmatpush1.msra.mxu0 %v378
    %1279 = vmatprep.subr.mxu0 %v382
    %1280 = vmatpush1.msra.mxu0 %v381
    %1281 = vmatprep.subr.mxu0 %v385
    %1282 = vmatpush1.msra.mxu0 %v384
    %1283 = vmatprep.subr.mxu0 %v388
    %1284 = vmatpush1.msra.mxu0 %v387
    %1285 = vmatprep.subr.mxu0 %v391
    %1286 = vmatpush1.msra.mxu0 %v390
    %1287 = vmatprep.subr.mxu0 %v394
    %1288 = vmatpush1.msra.mxu0 %v393
    %1289 = vmatprep.subr.mxu0 %v397
    %1290 = vmatpush1.msra.mxu0 %v396
    %1291 = vmatprep.subr.mxu0 %v400
    %1292 = vmatpush1.msra.mxu0 %v399
    %1293 = vmatprep.subr.mxu0 %v403
    %1294 = vmatpush1.msra.mxu0 %v402
    %1295 = vmatprep.subr.mxu0 %v406
    %1296 = vmatpush1.msra.mxu0 %v405
    %1297 = vmatprep.subr.mxu0 %v409
    %1298 = vmatpush1.msra.mxu0 %v408
    %1299 = vmatprep.subr.mxu0 %v412
    %1300 = vmatpush1.msra.mxu0 %v411
    %1301 = vmatprep.subr.mxu0 %v415
    %1302 = vmatpush1.msra.mxu0 %v414
    %1303 = vmatprep.subr.mxu0 %v418
    %1304 = vmatpush1.msra.mxu0 %v417
    %1305 = vmatprep.subr.mxu0 %v421
    %1306 = vmatpush1.msra.mxu0 %v420
    %1307 = vmatprep.subr.mxu0 0.0
    %1308 = vmatpush1.msra.mxu0 0.0
    %1309 = vmatprep.subr.mxu0 0.0
    %1310 = vmatpush1.msra.mxu0 0.0
    %1311 = vmatprep.subr.mxu0 0.0
    %1312 = vmatpush1.msra.mxu0 0.0
    %1313 = vmatprep.subr.mxu0 0.0
    %1314 = vmatpush1.msra.mxu0 0.0
    %1315 = vmatprep.subr.mxu0 0.0
    %1316 = vmatpush1.msra.mxu0 0.0
    %1317 = vmatprep.subr.mxu0 0.0
    %1318 = vmatpush1.msra.mxu0 0.0
    %1319 = vmatprep.subr.mxu0 0.0
    %1320 = vmatpush1.msra.mxu0 0.0
    %1321 = vmatprep.subr.mxu0 0.0
    %1322 = vmatpush1.msra.mxu0 0.0
    %1323 = vmatprep.subr.mxu0 0.0
    %1324 = vmatpush1.msra.mxu0 0.0
    %1325 = vmatprep.subr.mxu0 0.0
    %1326 = vmatpush1.msra.mxu0 0.0
    %1327 = vmatprep.subr.mxu0 0.0
    %1328 = vmatpush1.msra.mxu0 0.0
    %1329 = vmatprep.subr.mxu0 0.0
    %1330 = vmatpush1.msra.mxu0 0.0
    %1331 = vmatprep.subr.mxu0 0.0
    %1332 = vmatpush1.msra.mxu0 0.0
    %1333 = vmatprep.subr.mxu0 0.0
    %1334 = vmatpush1.msra.mxu0 0.0
    %1335 = vmatprep.subr.mxu0 0.0
    %1336 = vmatpush1.msra.mxu0 0.0
    %1337 = vmatprep.subr.mxu0 0.0
    %1338 = vmatpush1.msra.mxu0 0.0
    %1339 = vmatprep.mubr.f32.mxu0 0.0
    %1340 = vmatmul.mubr.f32.gmra.mrb[0].mxu0 %v1233
    %v1341 = vpop.f32.mrb[0].mxu0
    %v1342 = vadd.f32 0.0, %v1341
    %v1343 = vpop.f32.mrb[0].mxu0
    %v1344 = vadd.f32 0.0, %v1343
    %1345 = vdwg.mxu0
    %1346 = vmatprep.subr.mxu0 0.0
    %1347 = vmatpush1.msra.mxu0 %v377
    %1348 = vmatprep.subr.mxu0 0.0
    %1349 = vmatpush1.msra.mxu0 %v380
    %1350 = vmatprep.subr.mxu0 0.0
    %1351 = vmatpush1.msra.mxu0 %v383
    %1352 = vmatprep.subr.mxu0 0.0
    %1353 = vmatpush1.msra.mxu0 %v386
    %1354 = vmatprep.subr.mxu0 0.0
    %1355 = vmatpush1.msra.mxu0 %v389
    %1356 = vmatprep.subr.mxu0 0.0
    %1357 = vmatpush1.msra.mxu0 %v392
    %1358 = vmatprep.subr.mxu0 0.0
    %1359 = vmatpush1.msra.mxu0 %v395
    %1360 = vmatprep.subr.mxu0 0.0
    %1361 = vmatpush1.msra.mxu0 %v398
    %1362 = vmatprep.subr.mxu0 0.0
    %1363 = vmatpush1.msra.mxu0 %v401
    %1364 = vmatprep.subr.mxu0 0.0
    %1365 = vmatpush1.msra.mxu0 %v404
    %1366 = vmatprep.subr.mxu0 0.0
    %1367 = vmatpush1.msra.mxu0 %v407
    %1368 = vmatprep.subr.mxu0 0.0
    %1369 = vmatpush1.msra.mxu0 %v410
    %1370 = vmatprep.subr.mxu0 0.0
    %1371 = vmatpush1.msra.mxu0 %v413
    %1372 = vmatprep.subr.mxu0 0.0
    %1373 = vmatpush1.msra.mxu0 %v416
    %1374 = vmatprep.subr.mxu0 0.0
    %1375 = vmatpush1.msra.mxu0 %v419
    %1376 = vmatprep.subr.mxu0 0.0
    %1377 = vmatpush1.msra.mxu0 %v422
    %1378 = vmatprep.subr.mxu0 0.0
    %1379 = vmatpush1.msra.mxu0 0.0
    %1380 = vmatprep.subr.mxu0 0.0
    %1381 = vmatpush1.msra.mxu0 0.0
    %1382 = vmatprep.subr.mxu0 0.0
    %1383 = vmatpush1.msra.mxu0 0.0
    %1384 = vmatprep.subr.mxu0 0.0
    %1385 = vmatpush1.msra.mxu0 0.0
    %1386 = vmatprep.subr.mxu0 0.0
    %1387 = vmatpush1.msra.mxu0 0.0
    %1388 = vmatprep.subr.mxu0 0.0
    %1389 = vmatpush1.msra.mxu0 0.0
    %1390 = vmatprep.subr.mxu0 0.0
    %1391 = vmatpush1.msra.mxu0 0.0
    %1392 = vmatprep.subr.mxu0 0.0
    %1393 = vmatpush1.msra.mxu0 0.0
    %1394 = vmatprep.subr.mxu0 0.0
    %1395 = vmatpush1.msra.mxu0 0.0
    %1396 = vmatprep.subr.mxu0 0.0
    %1397 = vmatpush1.msra.mxu0 0.0
    %1398 = vmatprep.subr.mxu0 0.0
    %1399 = vmatpush1.msra.mxu0 0.0
    %1400 = vmatprep.subr.mxu0 0.0
    %1401 = vmatpush1.msra.mxu0 0.0
    %1402 = vmatprep.subr.mxu0 0.0
    %1403 = vmatpush1.msra.mxu0 0.0
    %1404 = vmatprep.subr.mxu0 0.0
    %1405 = vmatpush1.msra.mxu0 0.0
    %1406 = vmatprep.subr.mxu0 0.0
    %1407 = vmatpush1.msra.mxu0 0.0
    %1408 = vmatprep.subr.mxu0 0.0
    %1409 = vmatpush1.msra.mxu0 0.0
    %1410 = vmatprep.mubr.f32.mxu0 0.0
    %1411 = vmatmul.mubr.f32.gmra.mrb[0].mxu0 %v1233
    %v1412 = vpop.f32.mrb[0].mxu0
    %v1413 = vadd.f32 0.0, %v1412
    %v1414 = vpop.f32.mrb[0].mxu0
    %1415 = vdwg.mxu0
    %v1416 = vadd.f32 %v1272, %v1342
    %v1417 = vxor.u32 %v1416, 2147483648
    %v1418 = vmul.f32 %v1417, 1.442695
    %v1419 = vpow.pop %v1418
    %v1420 = vadd.f32 %v1419, 1.0
    %v1421 = vrcp.pop %v1420
    %v1422 = vmul.f32 1.0, %v1421
    %v1423 = vadd.f32 %v1273, %v1344
    %v1424 = vxor.u32 %v1423, 2147483648
    %v1425 = vmul.f32 %v1424, 1.442695
    %v1426 = vpow.pop %v1425
    %v1427 = vadd.f32 %v1426, 1.0
    %v1428 = vrcp.pop %v1427
    %v1429 = vmul.f32 1.0, %v1428
    %v1430 = vmul.f32 %v1422, %v1413
    %v1431 = vadd.f32 %v1274, %v1430
    %v1432 = vtanh.pop %v1431
    %v1433 = vsub.f32 1.0, %v1429
    %v1434 = vmul.f32 %v1433, %v1432
    %v1435 = vmul.f32 %v1429, %v1233
    %v1436 = vadd.f32 %v1434, %v1435
    %1437 = vst [vmem:[#allocation4 + $0x4] sm:$0x1] %v1436
    %1438 = vst [vmem:[%s625 + $0x3] sm:$0x2] %v1436
    %s1439 = scalar_lea.vmem [#allocation3], 5
    %v1440 = vld [vmem:[%s1439] ss:$8 sm:$0x7]
    %s1441 = scalar_lea.vmem %s371, 5 [#allocation3]
    %v1442 = vld [vmem:[%s1441] ss:$8 sm:$0x7]
    %v1444 = vlaneseq
    %v1445 = vshrl.u32 %v1444, 7
    %v1446 = vsub.s32 0, %v1445
    %v1447 = vrot.slane %v1440, %v1446
    %v1448 = vlaneseq
    %v1449 = vshrl.u32 %v1448, 7
    %v1450 = vsub.s32 1, %v1449
    %v1451 = vrot.slane %v1440, %v1450
    %v1452 = vlaneseq
    %v1453 = vshrl.u32 %v1452, 7
    %v1454 = vsub.s32 2, %v1453
    %v1455 = vrot.slane %v1440, %v1454
    %v1460 = vlaneseq
    %v1461 = vshrl.u32 %v1460, 7
    %v1462 = vsub.s32 0, %v1461
    %v1463 = vrot.slane %v1442, %v1462
    %v1464 = vlaneseq
    %v1465 = vshrl.u32 %v1464, 7
    %v1466 = vsub.s32 1, %v1465
    %v1467 = vrot.slane %v1442, %v1466
    %v1468 = vlaneseq
    %v1469 = vshrl.u32 %v1468, 7
    %v1470 = vsub.s32 2, %v1469
    %v1471 = vrot.slane %v1442, %v1470
    %v1475 = vsel %vm458, %v1447, %v1463
    %v1476 = vsel %vm458, %v1451, %v1467
    %v1477 = vsel %vm458, %v1455, %v1471
    %1478 = vmatprep.subr.mxu0 %v376
    %1479 = vmatpush1.msra.mxu0 %v375
    %1480 = vmatprep.subr.mxu0 %v379
    %1481 = vmatpush1.msra.mxu0 %v378
    %1482 = vmatprep.subr.mxu0 %v382
    %1483 = vmatpush1.msra.mxu0 %v381
    %1484 = vmatprep.subr.mxu0 %v385
    %1485 = vmatpush1.msra.mxu0 %v384
    %1486 = vmatprep.subr.mxu0 %v388
    %1487 = vmatpush1.msra.mxu0 %v387
    %1488 = vmatprep.subr.mxu0 %v391
    %1489 = vmatpush1.msra.mxu0 %v390
    %1490 = vmatprep.subr.mxu0 %v394
    %1491 = vmatpush1.msra.mxu0 %v393
    %1492 = vmatprep.subr.mxu0 %v397
    %1493 = vmatpush1.msra.mxu0 %v396
    %1494 = vmatprep.subr.mxu0 %v400
    %1495 = vmatpush1.msra.mxu0 %v399
    %1496 = vmatprep.subr.mxu0 %v403
    %1497 = vmatpush1.msra.mxu0 %v402
    %1498 = vmatprep.subr.mxu0 %v406
    %1499 = vmatpush1.msra.mxu0 %v405
    %1500 = vmatprep.subr.mxu0 %v409
    %1501 = vmatpush1.msra.mxu0 %v408
    %1502 = vmatprep.subr.mxu0 %v412
    %1503 = vmatpush1.msra.mxu0 %v411
    %1504 = vmatprep.subr.mxu0 %v415
    %1505 = vmatpush1.msra.mxu0 %v414
    %1506 = vmatprep.subr.mxu0 %v418
    %1507 = vmatpush1.msra.mxu0 %v417
    %1508 = vmatprep.subr.mxu0 %v421
    %1509 = vmatpush1.msra.mxu0 %v420
    %1510 = vmatprep.subr.mxu0 0.0
    %1511 = vmatpush1.msra.mxu0 0.0
    %1512 = vmatprep.subr.mxu0 0.0
    %1513 = vmatpush1.msra.mxu0 0.0
    %1514 = vmatprep.subr.mxu0 0.0
    %1515 = vmatpush1.msra.mxu0 0.0
    %1516 = vmatprep.subr.mxu0 0.0
    %1517 = vmatpush1.msra.mxu0 0.0
    %1518 = vmatprep.subr.mxu0 0.0
    %1519 = vmatpush1.msra.mxu0 0.0
    %1520 = vmatprep.subr.mxu0 0.0
    %1521 = vmatpush1.msra.mxu0 0.0
    %1522 = vmatprep.subr.mxu0 0.0
    %1523 = vmatpush1.msra.mxu0 0.0
    %1524 = vmatprep.subr.mxu0 0.0
    %1525 = vmatpush1.msra.mxu0 0.0
    %1526 = vmatprep.subr.mxu0 0.0
    %1527 = vmatpush1.msra.mxu0 0.0
    %1528 = vmatprep.subr.mxu0 0.0
    %1529 = vmatpush1.msra.mxu0 0.0
    %1530 = vmatprep.subr.mxu0 0.0
    %1531 = vmatpush1.msra.mxu0 0.0
    %1532 = vmatprep.subr.mxu0 0.0
    %1533 = vmatpush1.msra.mxu0 0.0
    %1534 = vmatprep.subr.mxu0 0.0
    %1535 = vmatpush1.msra.mxu0 0.0
    %1536 = vmatprep.subr.mxu0 0.0
    %1537 = vmatpush1.msra.mxu0 0.0
    %1538 = vmatprep.subr.mxu0 0.0
    %1539 = vmatpush1.msra.mxu0 0.0
    %1540 = vmatprep.subr.mxu0 0.0
    %1541 = vmatpush1.msra.mxu0 0.0
    %1542 = vmatprep.mubr.f32.mxu0 0.0
    %1543 = vmatmul.mubr.f32.gmra.mrb[0].mxu0 %v1436
    %v1544 = vpop.f32.mrb[0].mxu0
    %v1545 = vadd.f32 0.0, %v1544
    %v1546 = vpop.f32.mrb[0].mxu0
    %v1547 = vadd.f32 0.0, %v1546
    %1548 = vdwg.mxu0
    %1549 = vmatprep.subr.mxu0 0.0
    %1550 = vmatpush1.msra.mxu0 %v377
    %1551 = vmatprep.subr.mxu0 0.0
    %1552 = vmatpush1.msra.mxu0 %v380
    %1553 = vmatprep.subr.mxu0 0.0
    %1554 = vmatpush1.msra.mxu0 %v383
    %1555 = vmatprep.subr.mxu0 0.0
    %1556 = vmatpush1.msra.mxu0 %v386
    %1557 = vmatprep.subr.mxu0 0.0
    %1558 = vmatpush1.msra.mxu0 %v389
    %1559 = vmatprep.subr.mxu0 0.0
    %1560 = vmatpush1.msra.mxu0 %v392
    %1561 = vmatprep.subr.mxu0 0.0
    %1562 = vmatpush1.msra.mxu0 %v395
    %1563 = vmatprep.subr.mxu0 0.0
    %1564 = vmatpush1.msra.mxu0 %v398
    %1565 = vmatprep.subr.mxu0 0.0
    %1566 = vmatpush1.msra.mxu0 %v401
    %1567 = vmatprep.subr.mxu0 0.0
    %1568 = vmatpush1.msra.mxu0 %v404
    %1569 = vmatprep.subr.mxu0 0.0
    %1570 = vmatpush1.msra.mxu0 %v407
    %1571 = vmatprep.subr.mxu0 0.0
    %1572 = vmatpush1.msra.mxu0 %v410
    %1573 = vmatprep.subr.mxu0 0.0
    %1574 = vmatpush1.msra.mxu0 %v413
    %1575 = vmatprep.subr.mxu0 0.0
    %1576 = vmatpush1.msra.mxu0 %v416
    %1577 = vmatprep.subr.mxu0 0.0
    %1578 = vmatpush1.msra.mxu0 %v419
    %1579 = vmatprep.subr.mxu0 0.0
    %1580 = vmatpush1.msra.mxu0 %v422
    %1581 = vmatprep.subr.mxu0 0.0
    %1582 = vmatpush1.msra.mxu0 0.0
    %1583 = vmatprep.subr.mxu0 0.0
    %1584 = vmatpush1.msra.mxu0 0.0
    %1585 = vmatprep.subr.mxu0 0.0
    %1586 = vmatpush1.msra.mxu0 0.0
    %1587 = vmatprep.subr.mxu0 0.0
    %1588 = vmatpush1.msra.mxu0 0.0
    %1589 = vmatprep.subr.mxu0 0.0
    %1590 = vmatpush1.msra.mxu0 0.0
    %1591 = vmatprep.subr.mxu0 0.0
    %1592 = vmatpush1.msra.mxu0 0.0
    %1593 = vmatprep.subr.mxu0 0.0
    %1594 = vmatpush1.msra.mxu0 0.0
    %1595 = vmatprep.subr.mxu0 0.0
    %1596 = vmatpush1.msra.mxu0 0.0
    %1597 = vmatprep.subr.mxu0 0.0
    %1598 = vmatpush1.msra.mxu0 0.0
    %1599 = vmatprep.subr.mxu0 0.0
    %1600 = vmatpush1.msra.mxu0 0.0
    %1601 = vmatprep.subr.mxu0 0.0
    %1602 = vmatpush1.msra.mxu0 0.0
    %1603 = vmatprep.subr.mxu0 0.0
    %1604 = vmatpush1.msra.mxu0 0.0
    %1605 = vmatprep.subr.mxu0 0.0
    %1606 = vmatpush1.msra.mxu0 0.0
    %1607 = vmatprep.subr.mxu0 0.0
    %1608 = vmatpush1.msra.mxu0 0.0
    %1609 = vmatprep.subr.mxu0 0.0
    %1610 = vmatpush1.msra.mxu0 0.0
    %1611 = vmatprep.subr.mxu0 0.0
    %1612 = vmatpush1.msra.mxu0 0.0
    %1613 = vmatprep.mubr.f32.mxu0 0.0
    %1614 = vmatmul.mubr.f32.gmra.mrb[0].mxu0 %v1436
    %v1615 = vpop.f32.mrb[0].mxu0
    %v1616 = vadd.f32 0.0, %v1615
    %v1617 = vpop.f32.mrb[0].mxu0
    %1618 = vdwg.mxu0
    %v1619 = vadd.f32 %v1475, %v1545
    %v1620 = vxor.u32 %v1619, 2147483648
    %v1621 = vmul.f32 %v1620, 1.442695
    %v1622 = vpow.pop %v1621
    %v1623 = vadd.f32 %v1622, 1.0
    %v1624 = vrcp.pop %v1623
    %v1625 = vmul.f32 1.0, %v1624
    %v1626 = vadd.f32 %v1476, %v1547
    %v1627 = vxor.u32 %v1626, 2147483648
    %v1628 = vmul.f32 %v1627, 1.442695
    %v1629 = vpow.pop %v1628
    %v1630 = vadd.f32 %v1629, 1.0
    %v1631 = vrcp.pop %v1630
    %v1632 = vmul.f32 1.0, %v1631
    %v1633 = vmul.f32 %v1625, %v1616
    %v1634 = vadd.f32 %v1477, %v1633
    %v1635 = vtanh.pop %v1634
    %v1636 = vsub.f32 1.0, %v1632
    %v1637 = vmul.f32 %v1636, %v1635
    %v1638 = vmul.f32 %v1632, %v1436
    %v1639 = vadd.f32 %v1637, %v1638
    %1640 = vst [vmem:[#allocation4 + $0x5] sm:$0x1] %v1639
    %1641 = vst [vmem:[%s625 + $0x4] sm:$0x2] %v1639
    %1642 = vst [vmem:[#allocation2] sm:$0x3] %v1639
    // Predicated region
    $region42: #{tpu_custom_call.1} parent=1 // pred_check
      %p1643 = pneg %p46
    $region43: #{tpu_custom_call.1} parent=1 // pred_check_branch
      %1645 = sbr.rel (%p1643) target = $region45
    $region44: #{tpu_custom_call.1} parent=1 // pred_region
      %1646 = vst [vmem:[#allocation8] sm:$0x3] %v1639
    $region45: #{tpu_custom_call.1} parent=1 // pred_fallthru
      _
    %v1647 = vld [vmem:[%s4] sm:$0xff]
    %v1648 = vld [vmem:[%s4 + $0x8] sm:$0xff]
    %v1649 = vld [vmem:[%s4 + $0x10] sm:$0xff]
    %v1650 = vld [vmem:[%s4 + $0x18] sm:$0xff]
    %v1651 = vld [vmem:[%s4 + $0x20] sm:$0xff]
    %v1652 = vld [vmem:[%s4 + $0x28] sm:$0xff]
    %v1653 = vld [vmem:[%s4 + $0x30] sm:$0xff]
    %v1654 = vld [vmem:[%s4 + $0x38] sm:$0xff]
    %v1655 = vld [vmem:[%s4 + $0x40] sm:$0xff]
    %v1656 = vld [vmem:[%s4 + $0x48] sm:$0xff]
    %v1657 = vld [vmem:[%s4 + $0x50] sm:$0xff]
    %v1658 = vld [vmem:[%s4 + $0x58] sm:$0xff]
    %v1659 = vld [vmem:[%s4 + $0x60] sm:$0xff]
    %v1660 = vld [vmem:[%s4 + $0x68] sm:$0xff]
    %v1661 = vld [vmem:[%s4 + $0x70] sm:$0xff]
    %v1662 = vld [vmem:[%s4 + $0x78] sm:$0xff]
    %v1663 = vld [vmem:[%s5] sm:$0x1]
    %v1664 = vld [vmem:[%s6] sm:$0x1]
    %v1665 = vld [vmem:[%s7] sm:$0x1]
    %v1666 = vld [vmem:[#allocation4] sm:$0x3f]
    %v1668 = vlaneseq
    %v1669 = vshrl.u32 %v1668, 7
    %v1670 = vsub.s32 0, %v1669
    %v1671 = vrot.slane %v1663, %v1670
    %1673 = vmatprep.subr.mxu0 0.0
    %1674 = vmatpush1.msra.mxu0 %v1647
    %1675 = vmatprep.subr.mxu0 0.0
    %1676 = vmatpush1.msra.mxu0 %v1648
    %1677 = vmatprep.subr.mxu0 0.0
    %1678 = vmatpush1.msra.mxu0 %v1649
    %1679 = vmatprep.subr.mxu0 0.0
    %1680 = vmatpush1.msra.mxu0 %v1650
    %1681 = vmatprep.subr.mxu0 0.0
    %1682 = vmatpush1.msra.mxu0 %v1651
    %1683 = vmatprep.subr.mxu0 0.0
    %1684 = vmatpush1.msra.mxu0 %v1652
    %1685 = vmatprep.subr.mxu0 0.0
    %1686 = vmatpush1.msra.mxu0 %v1653
    %1687 = vmatprep.subr.mxu0 0.0
    %1688 = vmatpush1.msra.mxu0 %v1654
    %1689 = vmatprep.subr.mxu0 0.0
    %1690 = vmatpush1.msra.mxu0 %v1655
    %1691 = vmatprep.subr.mxu0 0.0
    %1692 = vmatpush1.msra.mxu0 %v1656
    %1693 = vmatprep.subr.mxu0 0.0
    %1694 = vmatpush1.msra.mxu0 %v1657
    %1695 = vmatprep.subr.mxu0 0.0
    %1696 = vmatpush1.msra.mxu0 %v1658
    %1697 = vmatprep.subr.mxu0 0.0
    %1698 = vmatpush1.msra.mxu0 %v1659
    %1699 = vmatprep.subr.mxu0 0.0
    %1700 = vmatpush1.msra.mxu0 %v1660
    %1701 = vmatprep.subr.mxu0 0.0
    %1702 = vmatpush1.msra.mxu0 %v1661
    %1703 = vmatprep.subr.mxu0 0.0
    %1704 = vmatpush1.msra.mxu0 %v1662
    %1705 = vmatprep.subr.mxu0 0.0
    %1706 = vmatpush1.msra.mxu0 0.0
    %1707 = vmatprep.subr.mxu0 0.0
    %1708 = vmatpush1.msra.mxu0 0.0
    %1709 = vmatprep.subr.mxu0 0.0
    %1710 = vmatpush1.msra.mxu0 0.0
    %1711 = vmatprep.subr.mxu0 0.0
    %1712 = vmatpush1.msra.mxu0 0.0
    %1713 = vmatprep.subr.mxu0 0.0
    %1714 = vmatpush1.msra.mxu0 0.0
    %1715 = vmatprep.subr.mxu0 0.0
    %1716 = vmatpush1.msra.mxu0 0.0
    %1717 = vmatprep.subr.mxu0 0.0
    %1718 = vmatpush1.msra.mxu0 0.0
    %1719 = vmatprep.subr.mxu0 0.0
    %1720 = vmatpush1.msra.mxu0 0.0
    %1721 = vmatprep.subr.mxu0 0.0
    %1722 = vmatpush1.msra.mxu0 0.0
    %1723 = vmatprep.subr.mxu0 0.0
    %1724 = vmatpush1.msra.mxu0 0.0
    %1725 = vmatprep.subr.mxu0 0.0
    %1726 = vmatpush1.msra.mxu0 0.0
    %1727 = vmatprep.subr.mxu0 0.0
    %1728 = vmatpush1.msra.mxu0 0.0
    %1729 = vmatprep.subr.mxu0 0.0
    %1730 = vmatpush1.msra.mxu0 0.0
    %1731 = vmatprep.subr.mxu0 0.0
    %1732 = vmatpush1.msra.mxu0 0.0
    %1733 = vmatprep.subr.mxu0 0.0
    %1734 = vmatpush1.msra.mxu0 0.0
    %1735 = vmatprep.subr.mxu0 0.0
    %1736 = vmatpush1.msra.mxu0 0.0
    %1737 = vmatprep.mubr.f32.mxu0 0.0
    %1738 = vmatmul.mubr.f32.gmra.mrb[0].mxu0 %v1666
    %v1739 = vpop.f32.mrb[0].mxu0
    %v1740 = vadd.f32 %v1671, %v1739
    %v1741 = vpop.f32.mrb[0].mxu0
    %1742 = vdwg.mxu0
    %vm1743 = vcmask 521216
    %v1744 = vsel %vm1743, %v1740, 0.0
    %1745 = vadd.xlane.f32.xlu0 %v1744
    %v1746 = vpop.xlane.xlu0 %1745
    %v1747 = vmul.f32 %v1746, 0.015625
    %v1748 = vsub.f32 %v1740, %v1747
    %v1749 = vmul.f32 %v1748, %v1748
    %v1750 = vsel %vm1743, %v1749, 0.0
    %1751 = vadd.xlane.f32.xlu0 %v1750
    %v1752 = vpop.xlane.xlu0 %1751
    %v1753 = vmul.f32 %v1752, 0.015625
    %v1754 = vadd.f32 %v1753, 1e-05
    %v1755 = vrsqrt.pop %v1754
    %v1756 = vmul.f32 %v1748, %v1755
    %v1758 = vlaneseq
    %v1759 = vshrl.u32 %v1758, 7
    %v1760 = vsub.s32 0, %v1759
    %v1761 = vrot.slane %v1664, %v1760
    %v1763 = vmul.f32 %v1756, %v1761
    %v1765 = vlaneseq
    %v1766 = vshrl.u32 %v1765, 7
    %v1767 = vsub.s32 0, %v1766
    %v1768 = vrot.slane %v1665, %v1767
    %v1770 = vadd.f32 %v1763, %v1768
    %1771 = vst.msk [vmem:[%s8] sm:$0x3f] %vm1743, %v1770
    %v1772 = vld [vmem:[%s625] sm:$0x3f]
    %1773 = vmatprep.subr.mxu0 0.0
    %1774 = vmatpush1.msra.mxu0 %v1647
    %1775 = vmatprep.subr.mxu0 0.0
    %1776 = vmatpush1.msra.mxu0 %v1648
    %1777 = vmatprep.subr.mxu0 0.0
    %1778 = vmatpush1.msra.mxu0 %v1649
    %1779 = vmatprep.subr.mxu0 0.0
    %1780 = vmatpush1.msra.mxu0 %v1650
    %1781 = vmatprep.subr.mxu0 0.0
    %1782 = vmatpush1.msra.mxu0 %v1651
    %1783 = vmatprep.subr.mxu0 0.0
    %1784 = vmatpush1.msra.mxu0 %v1652
    %1785 = vmatprep.subr.mxu0 0.0
    %1786 = vmatpush1.msra.mxu0 %v1653
    %1787 = vmatprep.subr.mxu0 0.0
    %1788 = vmatpush1.msra.mxu0 %v1654
    %1789 = vmatprep.subr.mxu0 0.0
    %1790 = vmatpush1.msra.mxu0 %v1655
    %1791 = vmatprep.subr.mxu0 0.0
    %1792 = vmatpush1.msra.mxu0 %v1656
    %1793 = vmatprep.subr.mxu0 0.0
    %1794 = vmatpush1.msra.mxu0 %v1657
    %1795 = vmatprep.subr.mxu0 0.0
    %1796 = vmatpush1.msra.mxu0 %v1658
    %1797 = vmatprep.subr.mxu0 0.0
    %1798 = vmatpush1.msra.mxu0 %v1659
    %1799 = vmatprep.subr.mxu0 0.0
    %1800 = vmatpush1.msra.mxu0 %v1660
    %1801 = vmatprep.subr.mxu0 0.0
    %1802 = vmatpush1.msra.mxu0 %v1661
    %1803 = vmatprep.subr.mxu0 0.0
    %1804 = vmatpush1.msra.mxu0 %v1662
    %1805 = vmatprep.subr.mxu0 0.0
    %1806 = vmatpush1.msra.mxu0 0.0
    %1807 = vmatprep.subr.mxu0 0.0
    %1808 = vmatpush1.msra.mxu0 0.0
    %1809 = vmatprep.subr.mxu0 0.0
    %1810 = vmatpush1.msra.mxu0 0.0
    %1811 = vmatprep.subr.mxu0 0.0
    %1812 = vmatpush1.msra.mxu0 0.0
    %1813 = vmatprep.subr.mxu0 0.0
    %1814 = vmatpush1.msra.mxu0 0.0
    %1815 = vmatprep.subr.mxu0 0.0
    %1816 = vmatpush1.msra.mxu0 0.0
    %1817 = vmatprep.subr.mxu0 0.0
    %1818 = vmatpush1.msra.mxu0 0.0
    %1819 = vmatprep.subr.mxu0 0.0
    %1820 = vmatpush1.msra.mxu0 0.0
    %1821 = vmatprep.subr.mxu0 0.0
    %1822 = vmatpush1.msra.mxu0 0.0
    %1823 = vmatprep.subr.mxu0 0.0
    %1824 = vmatpush1.msra.mxu0 0.0
    %1825 = vmatprep.subr.mxu0 0.0
    %1826 = vmatpush1.msra.mxu0 0.0
    %1827 = vmatprep.subr.mxu0 0.0
    %1828 = vmatpush1.msra.mxu0 0.0
    %1829 = vmatprep.subr.mxu0 0.0
    %1830 = vmatpush1.msra.mxu0 0.0
    %1831 = vmatprep.subr.mxu0 0.0
    %1832 = vmatpush1.msra.mxu0 0.0
    %1833 = vmatprep.subr.mxu0 0.0
    %1834 = vmatpush1.msra.mxu0 0.0
    %1835 = vmatprep.subr.mxu0 0.0
    %1836 = vmatpush1.msra.mxu0 0.0
    %1837 = vmatprep.mubr.f32.mxu0 0.0
    %1838 = vmatmul.mubr.f32.gmra.mrb[0].mxu0 %v1772
    %v1839 = vpop.f32.mrb[0].mxu0
    %v1840 = vadd.f32 %v1671, %v1839
    %v1841 = vpop.f32.mrb[0].mxu0
    %1842 = vdwg.mxu0
    %v1843 = vsel %vm1743, %v1840, 0.0
    %1844 = vadd.xlane.f32.xlu0 %v1843
    %v1845 = vpop.xlane.xlu0 %1844
    %v1846 = vmul.f32 %v1845, 0.015625
    %v1847 = vsub.f32 %v1840, %v1846
    %v1848 = vmul.f32 %v1847, %v1847
    %v1849 = vsel %vm1743, %v1848, 0.0
    %1850 = vadd.xlane.f32.xlu0 %v1849
    %v1851 = vpop.xlane.xlu0 %1850
    %v1852 = vmul.f32 %v1851, 0.015625
    %v1853 = vadd.f32 %v1852, 1e-05
    %v1854 = vrsqrt.pop %v1853
    %v1855 = vmul.f32 %v1847, %v1854
    %v1856 = vmul.f32 %v1855, %v1761
    %v1857 = vadd.f32 %v1856, %v1768
    %s1858 = scalar_lea.vmem %s8, 8
    %1859 = vst.msk [vmem:[%s1858] sm:$0x3f] %vm1743, %v1857
    // Predicated region
    $region46: #{tpu_custom_call.1} parent=1 // pred_check
      _
    $region47: #{tpu_custom_call.1} parent=1 // pred_check_branch
      %1861 = sbr.rel (0) target = $region49
    $region48: #{tpu_custom_call.1} parent=1 // pred_region
      _
    $region49: #{tpu_custom_call.1} parent=1 // pred_fallthru
      _
    // Predicated region
    $region50: #{tpu_custom_call.1} parent=1 // pred_check
      _
    $region51: #{tpu_custom_call.1} parent=1 // pred_check_branch
      %1863 = sbr.rel (0) target = $region53
    $region52: #{tpu_custom_call.1} parent=1 // pred_region
      %s1865 = ssub.s32 32, 32
      %1866 = vsyncadd [#allocation7], %s1865
      %s1868 = sshll.u32 [#allocation8], 4
      %s1869 = int_to_ptr.vmem [resolvable:$true] %s1868
      %1871 = dma.vmem_to_hbm [thread:$0]  %s1869, 32, %s9, [#allocation7]
    $region53: #{tpu_custom_call.1} parent=1 // pred_fallthru
      _
    // Predicated region
    $region54: #{tpu_custom_call.1} parent=1 // pred_check
      _
    $region55: #{tpu_custom_call.1} parent=1 // pred_check_branch
      %1873 = sbr.rel (0) target = $region57
    $region56: #{tpu_custom_call.1} parent=1 // pred_region
      _
    $region57: #{tpu_custom_call.1} parent=1 // pred_fallthru
      _
    // Predicated region
    $region58: #{tpu_custom_call.1} parent=1 // pred_check
      _
    $region59: #{tpu_custom_call.1} parent=1 // pred_check_branch
      %1875 = sbr.rel (0) target = $region61
    $region60: #{tpu_custom_call.1} parent=1 // pred_region
      %1876 = dma.done [#allocation7], 32
    $region61: #{tpu_custom_call.1} parent=1 // pred_fallthru
      _
    %1877 = vsyncpa [#allocation6], 1
    %1878 = vsyncpa [#allocation7], 1

</llo_original>
